<compile_context>
chip_gen: v6e
topology: v6e:2x2x1
jax: 0.10.0
libtpu: 0.0.40
codegen_flags: <defaults>
</compile_context>

<pallas_src>
import jax
import jax.numpy as jnp
from jax import lax
from jax.experimental import pallas as pl
from jax.experimental.pallas import tpu as pltpu


# Fixed geometry of the wrapped model.
N_BATCH = 2
C_IN, C_OUT = 4, 8
H = W = 16
KH = KW = 3
LROW = 128                   # padded lane width of one input row: (W+2)*C_IN = 72 -> 128
K_CONV = KH * LROW           # 384
N_CONV = W * C_OUT           # 128  (lane order w*C_OUT + cout == NHWC flatten within a row)
FC1_IN = H * N_CONV          # 2048
FC1_OUT = 32
FC2_OUT = 10

# Row offsets inside the packed weight slab (all multiples of 8 so every
# in-kernel static slice is sublane-tile aligned).
ROW_BCONV = K_CONV           # 384: conv bias tiled across the 16 w positions
ROW_B1 = 392                 # fc1 bias (lanes 0:32)
ROW_W2 = 400                 # fc2 weight (32 rows, lanes 0:10)
ROW_B2 = 432                 # fc2 bias (lanes 0:10)
SLAB_ROWS = 440              # multiple of 8


def _build_width_toeplitz(w_conv):
    """Fold the conv weight (C_OUT, C_IN, 3, 3) into T of shape (384, 128).

    T[kh*128 + w'*C_IN + cin, w*C_OUT + cout] = w_conv[cout, cin, kh, w' - w]
    (zero elsewhere), so that for output row h
        relu( sum_kh x_padrow[h+kh] @ T[kh*128:(kh+1)*128] + bias_row )
    is the conv+ReLU output row h in (w, cout) lane order.  Built once at init.
    """
    tw = jnp.zeros((K_CONV, N_CONV), jnp.float32)
    w_idx = jnp.arange(W)
    cols = w_idx[:, None] * C_OUT + jnp.arange(C_OUT)[None, :]          # (16, 8)
    for kh in range(KH):
        for kw in range(KW):
            for cin in range(C_IN):
                rows = kh * LROW + (w_idx + kw) * C_IN + cin             # (16,)
                vals = jnp.broadcast_to(w_conv[:, cin, kh, kw][None, :], (W, C_OUT))
                tw = tw.at[rows[:, None], cols].set(vals)
    return tw


def _pack_weight_slab(w_conv, b_conv, b_fc1, w_fc2, b_fc2):
    """Consolidate Toeplitz conv weight + all small params into one (440,128) slab."""
    slab = jnp.zeros((SLAB_ROWS, LROW), jnp.float32)
    slab = slab.at[0:K_CONV, :].set(_build_width_toeplitz(w_conv))
    slab = slab.at[ROW_BCONV, :].set(jnp.tile(b_conv, W))                # (128,)
    slab = slab.at[ROW_B1, :FC1_OUT].set(b_fc1)
    slab = slab.at[ROW_W2:ROW_W2 + FC1_OUT, :FC2_OUT].set(w_fc2.T)       # (32, 10)
    slab = slab.at[ROW_B2, :FC2_OUT].set(b_fc2)
    return slab


def _fused_cnn_kernel(x_ref, w_ref, w1_ref, o_ref):
    """conv3x3+ReLU -> flatten -> fc1+ReLU -> fc2, fully fused, all in VMEM.

    x_ref : (N, 18, 128) zero-padded NHWC input, one 128-lane slab per padded row
    w_ref : (440, 128)   packed slab: 3x(128,128) Toeplitz blocks, conv bias row,
                         fc1 bias, fc2 weight, fc2 bias (8-aligned row offsets)
    w1_ref: (2048, 32)   fc1 weight, rows ordered (h, w*8+cout) to match conv lanes
    o_ref : (N, 10)      logits
    """
    n = x_ref.shape[0]
    x = x_ref[...]                                           # (n, 18, 128)

    # ---- conv3x3 + bias + ReLU: 3 wide matmuls, M = n*16 = 32 -----------------
    acc = jnp.zeros((n * H, N_CONV), jnp.float32)
    for kh in range(KH):                                     # static unroll (3)
        # (n,16,128) -> (32,128): leading-dim merge, sublane count stays a
        # multiple of 8 and the lane dim is untouched (layout-preserving).
        lhs = x[:, kh:kh + H, :].reshape(n * H, LROW)
        t_kh = w_ref[kh * LROW:(kh + 1) * LROW, :]           # (128, 128)
        acc = acc + jnp.dot(lhs, t_kh, preferred_element_type=jnp.float32)
    bc = w_ref[ROW_BCONV:ROW_BCONV + 1, :]                   # (1, 128)
    cv = jnp.maximum(acc + bc, 0.0)                          # (32, 128)

    # ---- flatten (n,16,128) -> (n,2048) via 128-aligned lane concat ------------
    cv3 = cv.reshape(n, H, N_CONV)                           # leading-dim split only
    h1_in = jnp.concatenate([cv3[:, h, :] for h in range(H)], axis=1)   # (n, 2048)

    # ---- fc1 + ReLU: one matmul, decoupled from the conv chain -----------------
    b1 = w_ref[ROW_B1:ROW_B1 + 1, 0:FC1_OUT]                 # (1, 32)
    h1 = jnp.maximum(
        jnp.dot(h1_in, w1_ref[...], preferred_element_type=jnp.float32) + b1, 0.0)

    # ---- fc2 --------------------------------------------------------------------
    w2 = w_ref[ROW_W2:ROW_W2 + FC1_OUT, 0:FC2_OUT]           # (32, 10)
    b2 = w_ref[ROW_B2:ROW_B2 + 1, 0:FC2_OUT]                 # (1, 10)
    out = jnp.dot(h1, w2, preferred_element_type=jnp.float32) + b2
    o_ref[...] = out.astype(o_ref.dtype)


@jax.jit
def _fused_forward(x_nchw, wslab, w1flat):
    n = x_nchw.shape[0]
    # Tiny layout glue on the 8 KiB input: NCHW -> NHWC, zero-pad H/W by 1,
    # pad each (W+2)*C_IN = 72-wide row slab to a full 128-lane tile.
    # TODO(synk): at large batch accept NHWC / move the zero-pad into the kernel
    # (masked store at lane offset C_IN) to avoid an extra HBM round trip.
    x_nhwc = jnp.transpose(x_nchw, (0, 2, 3, 1))
    x_pad = jnp.pad(x_nhwc, ((0, 0), (1, 1), (1, 1), (0, 0)))
    x_rows = x_pad.reshape(n, H + 2, (W + 2) * C_IN)
    x_rows = jnp.pad(x_rows, ((0, 0), (0, 0), (0, LROW - (W + 2) * C_IN)))  # (n,18,128)

    flops = 2 * (KH * n * H * LROW * N_CONV + n * FC1_IN * FC1_OUT + n * FC1_OUT * FC2_OUT)
    bytes_accessed = 4 * (x_rows.size + wslab.size + w1flat.size + n * FC2_OUT)
    vmem = pl.BlockSpec(memory_space=pltpu.MemorySpace.VMEM)
    # TODO(synk): once batch >> 128, add a batch grid axis with
    # dimension_semantics=("parallel",) (v7x 2 TCs) and bf16 MXU inputs;
    # re-derive the batch tile against v7x's 64 MiB VMEM, not v5e/v6e's 128 MiB.
    return pl.pallas_call(
        _fused_cnn_kernel,
        out_shape=jax.ShapeDtypeStruct((n, FC2_OUT), jnp.float32),
        in_specs=[vmem, vmem, vmem],
        out_specs=vmem,
        cost_estimate=pl.CostEstimate(flops=flops, transcendentals=0,
                                      bytes_accessed=bytes_accessed),
    )(x_rows, wslab, w1flat)


class GradExtractorPallas:
    """JAX/Pallas analogue of GradExtractor wrapping the small CNN above.

    Parameters are stored in PyTorch convention; kernel-ready operands
    (packed Toeplitz/param slab, permuted+flattened fc1 weight) are derived
    once at init so the hot path is a single fused pallas_call with 3 inputs.
    """

    def __init__(self, key, param_names=()):
        k = jax.random.split(key, 6)
        bnd = (C_IN * KH * KW) ** -0.5
        w_conv = jax.random.uniform(k[0], (C_OUT, C_IN, KH, KW), jnp.float32, -bnd, bnd)
        b_conv = jax.random.uniform(k[1], (C_OUT,), jnp.float32, -bnd, bnd)
        bnd = (C_OUT * H * W) ** -0.5
        w_fc1 = jax.random.uniform(k[2], (FC1_OUT, C_OUT * H * W), jnp.float32, -bnd, bnd)
        b_fc1 = jax.random.uniform(k[3], (FC1_OUT,), jnp.float32, -bnd, bnd)
        bnd = FC1_OUT ** -0.5
        w_fc2 = jax.random.uniform(k[4], (FC2_OUT, FC1_OUT), jnp.float32, -bnd, bnd)
        b_fc2 = jax.random.uniform(k[5], (FC2_OUT,), jnp.float32, -bnd, bnd)

        # PyTorch-convention parameters (what model.named_parameters() yields).
        self.params = {
            "conv1.weight": w_conv, "conv1.bias": b_conv,
            "fc1.weight": w_fc1, "fc1.bias": b_fc1,
            "fc2.weight": w_fc2, "fc2.bias": b_fc2,
        }
        self.param_names = tuple(param_names)
        self._grads = {}

        # GradExtractor.__init__ behaviour: report every named parameter.
        for name, p in self.params.items():
            print(f"{name:<30}: {list(p.shape)}")
        # TODO(synk): param.register_hook / grad.clone() capture is backward-pass
        # autograd machinery; in JAX it would be jax.grad / jax.vjp over this
        # forward -- there is no forward-kernel equivalent.

        # One-time derivation of kernel-ready operands (not on the hot path).
        self.wslab = _pack_weight_slab(w_conv, b_conv, b_fc1, w_fc2, b_fc2)  # (440,128)
        # fc1 rows are the NCHW flatten (cout*256 + h*16 + w); permute to the
        # kernel's (h, w*8 + cout) row order and flatten to (2048, 32).
        w1k = (w_fc1.T.reshape(C_OUT, H, W, FC1_OUT)
               .transpose(1, 2, 0, 3)
               .reshape(H, N_CONV, FC1_OUT))
        self.w1flat = w1k.reshape(FC1_IN, FC1_OUT)                           # (2048, 32)

    def forward(self, x):
        self._grads.clear()          # mirrors GradExtractor.forward
        return _fused_forward(x, self.wslab, self.w1flat)

    def __call__(self, x):
        return self.forward(x)


def _reference_forward(x, params):
    """Pure-JAX reference with PyTorch semantics (for correctness check)."""
    conv = lax.conv_general_dilated(
        x, params["conv1.weight"], window_strides=(1, 1),
        padding=((1, 1), (1, 1)),
        dimension_numbers=("NCHW", "OIHW", "NCHW"),
        precision=lax.Precision.HIGHEST)
    conv = jnp.maximum(conv + params["conv1.bias"][None, :, None, None], 0.0)
    flat = conv.reshape(conv.shape[0], -1)                 # == torch.flatten(x, 1)
    h1 = jnp.maximum(
        jnp.dot(flat, params["fc1.weight"].T, precision=lax.Precision.HIGHEST)
        + params["fc1.bias"], 0.0)
    return (jnp.dot(h1, params["fc2.weight"].T, precision=lax.Precision.HIGHEST)
            + params["fc2.bias"])


if __name__ == "__main__":
    key = jax.random.PRNGKey(0)
    k_model, k_x = jax.random.split(key)
    model = GradExtractorPallas(k_model, param_names=("fc1.weight",))

    x = jax.random.normal(k_x, (N_BATCH, C_IN, H, W), dtype=jnp.float32)   # NCHW
    out = jax.block_until_ready(model(x))

    assert out.shape == (N_BATCH, FC2_OUT) and out.dtype == jnp.float32

    ref = jax.block_until_ready(_reference_forward(x, model.params))
    assert jnp.allclose(out, ref, atol=2e-3, rtol=2e-3), (
        f"max abs err {jnp.max(jnp.abs(out - ref))}")

    print("KERNEL_OK")
</pallas_src>

<mosaic_0001>
module attributes {stable_mosaic.version = 11 : i64} {
  func.func @_fused_cnn_kernel(%arg0: memref<2x18x128xf32, #tpu.memory_space<vmem>>, %arg1: memref<440x128xf32, #tpu.memory_space<vmem>>, %arg2: memref<2048x32xf32, #tpu.memory_space<vmem>>, %arg3: memref<2x10xf32, #tpu.memory_space<vmem>>) attributes {dimension_semantics = [], scalar_prefetch = 0 : i64, scratch_operands = 0 : i64, tpu.core_type = #tpu.core_type<tc>} {
    %c0 = arith.constant 0 : index
    %c0_0 = arith.constant 0 : index
    %c0_1 = arith.constant 0 : index
    %0 = vector.load %arg0[%c0, %c0_0, %c0_1] : memref<2x18x128xf32, #tpu.memory_space<vmem>>, vector<2x18x128xf32>
    %cst = arith.constant 0.000000e+00 : f32
    %1 = vector.broadcast %cst : f32 to vector<32x128xf32>
    %2 = vector.extract_strided_slice %0 {offsets = [0, 0, 0], sizes = [2, 16, 128], strides = [1, 1, 1]} : vector<2x18x128xf32> to vector<2x16x128xf32>
    %3 = vector.shape_cast %2 : vector<2x16x128xf32> to vector<32x128xf32>
    %c0_2 = arith.constant 0 : index
    %c0_3 = arith.constant 0 : index
    %4 = vector.load %arg1[%c0_2, %c0_3] : memref<440x128xf32, #tpu.memory_space<vmem>>, vector<128x128xf32>
    %cst_4 = arith.constant dense<0.000000e+00> : vector<32x128xf32>
    %5 = tpu.matmul %3, %4, %cst_4 {dimension_numbers = #tpu.dot_dimension_numbers<[1], [0], [0], [1], [0, 0, 1, 1], [], []>} : vector<32x128xf32>, vector<128x128xf32>, vector<32x128xf32> -> vector<32x128xf32>
    %6 = arith.addf %1, %5 : vector<32x128xf32>
    %7 = vector.extract_strided_slice %0 {offsets = [0, 1, 0], sizes = [2, 16, 128], strides = [1, 1, 1]} : vector<2x18x128xf32> to vector<2x16x128xf32>
    %8 = vector.shape_cast %7 : vector<2x16x128xf32> to vector<32x128xf32>
    %c128 = arith.constant 128 : index
    %c0_5 = arith.constant 0 : index
    %9 = vector.load %arg1[%c128, %c0_5] : memref<440x128xf32, #tpu.memory_space<vmem>>, vector<128x128xf32>
    %cst_6 = arith.constant dense<0.000000e+00> : vector<32x128xf32>
    %10 = tpu.matmul %8, %9, %cst_6 {dimension_numbers = #tpu.dot_dimension_numbers<[1], [0], [0], [1], [0, 0, 1, 1], [], []>} : vector<32x128xf32>, vector<128x128xf32>, vector<32x128xf32> -> vector<32x128xf32>
    %11 = arith.addf %6, %10 : vector<32x128xf32>
    %12 = vector.extract_strided_slice %0 {offsets = [0, 2, 0], sizes = [2, 16, 128], strides = [1, 1, 1]} : vector<2x18x128xf32> to vector<2x16x128xf32>
    %13 = vector.shape_cast %12 : vector<2x16x128xf32> to vector<32x128xf32>
    %c256 = arith.constant 256 : index
    %c0_7 = arith.constant 0 : index
    %14 = vector.load %arg1[%c256, %c0_7] : memref<440x128xf32, #tpu.memory_space<vmem>>, vector<128x128xf32>
    %cst_8 = arith.constant dense<0.000000e+00> : vector<32x128xf32>
    %15 = tpu.matmul %13, %14, %cst_8 {dimension_numbers = #tpu.dot_dimension_numbers<[1], [0], [0], [1], [0, 0, 1, 1], [], []>} : vector<32x128xf32>, vector<128x128xf32>, vector<32x128xf32> -> vector<32x128xf32>
    %16 = arith.addf %11, %15 : vector<32x128xf32>
    %c384 = arith.constant 384 : index
    %c0_9 = arith.constant 0 : index
    %17 = vector.load %arg1[%c384, %c0_9] : memref<440x128xf32, #tpu.memory_space<vmem>>, vector<1x128xf32>
    %18 = vector.broadcast %17 : vector<1x128xf32> to vector<32x128xf32>
    %19 = arith.addf %16, %18 : vector<32x128xf32>
    %cst_10 = arith.constant 0.000000e+00 : f32
    %20 = vector.broadcast %cst_10 : f32 to vector<32x128xf32>
    %21 = arith.maximumf %19, %20 : vector<32x128xf32>
    %22 = vector.shape_cast %21 : vector<32x128xf32> to vector<2x16x128xf32>
    %23 = vector.extract_strided_slice %22 {offsets = [0, 0, 0], sizes = [2, 1, 128], strides = [1, 1, 1]} : vector<2x16x128xf32> to vector<2x1x128xf32>
    %24 = vector.shape_cast %23 : vector<2x1x128xf32> to vector<2x128xf32>
    %25 = vector.extract_strided_slice %22 {offsets = [0, 1, 0], sizes = [2, 1, 128], strides = [1, 1, 1]} : vector<2x16x128xf32> to vector<2x1x128xf32>
    %26 = vector.shape_cast %25 : vector<2x1x128xf32> to vector<2x128xf32>
    %27 = vector.extract_strided_slice %22 {offsets = [0, 2, 0], sizes = [2, 1, 128], strides = [1, 1, 1]} : vector<2x16x128xf32> to vector<2x1x128xf32>
    %28 = vector.shape_cast %27 : vector<2x1x128xf32> to vector<2x128xf32>
    %29 = vector.extract_strided_slice %22 {offsets = [0, 3, 0], sizes = [2, 1, 128], strides = [1, 1, 1]} : vector<2x16x128xf32> to vector<2x1x128xf32>
    %30 = vector.shape_cast %29 : vector<2x1x128xf32> to vector<2x128xf32>
    %31 = vector.extract_strided_slice %22 {offsets = [0, 4, 0], sizes = [2, 1, 128], strides = [1, 1, 1]} : vector<2x16x128xf32> to vector<2x1x128xf32>
    %32 = vector.shape_cast %31 : vector<2x1x128xf32> to vector<2x128xf32>
    %33 = vector.extract_strided_slice %22 {offsets = [0, 5, 0], sizes = [2, 1, 128], strides = [1, 1, 1]} : vector<2x16x128xf32> to vector<2x1x128xf32>
    %34 = vector.shape_cast %33 : vector<2x1x128xf32> to vector<2x128xf32>
    %35 = vector.extract_strided_slice %22 {offsets = [0, 6, 0], sizes = [2, 1, 128], strides = [1, 1, 1]} : vector<2x16x128xf32> to vector<2x1x128xf32>
    %36 = vector.shape_cast %35 : vector<2x1x128xf32> to vector<2x128xf32>
    %37 = vector.extract_strided_slice %22 {offsets = [0, 7, 0], sizes = [2, 1, 128], strides = [1, 1, 1]} : vector<2x16x128xf32> to vector<2x1x128xf32>
    %38 = vector.shape_cast %37 : vector<2x1x128xf32> to vector<2x128xf32>
    %39 = vector.extract_strided_slice %22 {offsets = [0, 8, 0], sizes = [2, 1, 128], strides = [1, 1, 1]} : vector<2x16x128xf32> to vector<2x1x128xf32>
    %40 = vector.shape_cast %39 : vector<2x1x128xf32> to vector<2x128xf32>
    %41 = vector.extract_strided_slice %22 {offsets = [0, 9, 0], sizes = [2, 1, 128], strides = [1, 1, 1]} : vector<2x16x128xf32> to vector<2x1x128xf32>
    %42 = vector.shape_cast %41 : vector<2x1x128xf32> to vector<2x128xf32>
    %43 = vector.extract_strided_slice %22 {offsets = [0, 10, 0], sizes = [2, 1, 128], strides = [1, 1, 1]} : vector<2x16x128xf32> to vector<2x1x128xf32>
    %44 = vector.shape_cast %43 : vector<2x1x128xf32> to vector<2x128xf32>
    %45 = vector.extract_strided_slice %22 {offsets = [0, 11, 0], sizes = [2, 1, 128], strides = [1, 1, 1]} : vector<2x16x128xf32> to vector<2x1x128xf32>
    %46 = vector.shape_cast %45 : vector<2x1x128xf32> to vector<2x128xf32>
    %47 = vector.extract_strided_slice %22 {offsets = [0, 12, 0], sizes = [2, 1, 128], strides = [1, 1, 1]} : vector<2x16x128xf32> to vector<2x1x128xf32>
    %48 = vector.shape_cast %47 : vector<2x1x128xf32> to vector<2x128xf32>
    %49 = vector.extract_strided_slice %22 {offsets = [0, 13, 0], sizes = [2, 1, 128], strides = [1, 1, 1]} : vector<2x16x128xf32> to vector<2x1x128xf32>
    %50 = vector.shape_cast %49 : vector<2x1x128xf32> to vector<2x128xf32>
    %51 = vector.extract_strided_slice %22 {offsets = [0, 14, 0], sizes = [2, 1, 128], strides = [1, 1, 1]} : vector<2x16x128xf32> to vector<2x1x128xf32>
    %52 = vector.shape_cast %51 : vector<2x1x128xf32> to vector<2x128xf32>
    %53 = vector.extract_strided_slice %22 {offsets = [0, 15, 0], sizes = [2, 1, 128], strides = [1, 1, 1]} : vector<2x16x128xf32> to vector<2x1x128xf32>
    %54 = vector.shape_cast %53 : vector<2x1x128xf32> to vector<2x128xf32>
    %55 = tpu.concatenate %24, %26, %28, %30, %32, %34, %36, %38, %40, %42, %44, %46, %48, %50, %52, %54 in 1 : vector<2x128xf32>, vector<2x128xf32>, vector<2x128xf32>, vector<2x128xf32>, vector<2x128xf32>, vector<2x128xf32>, vector<2x128xf32>, vector<2x128xf32>, vector<2x128xf32>, vector<2x128xf32>, vector<2x128xf32>, vector<2x128xf32>, vector<2x128xf32>, vector<2x128xf32>, vector<2x128xf32>, vector<2x128xf32> -> vector<2x2048xf32>
    %c392 = arith.constant 392 : index
    %c0_11 = arith.constant 0 : index
    %56 = vector.load %arg1[%c392, %c0_11] : memref<440x128xf32, #tpu.memory_space<vmem>>, vector<1x32xf32>
    %c0_12 = arith.constant 0 : index
    %c0_13 = arith.constant 0 : index
    %57 = vector.load %arg2[%c0_12, %c0_13] : memref<2048x32xf32, #tpu.memory_space<vmem>>, vector<2048x32xf32>
    %cst_14 = arith.constant dense<0.000000e+00> : vector<2x32xf32>
    %58 = tpu.matmul %55, %57, %cst_14 {dimension_numbers = #tpu.dot_dimension_numbers<[1], [0], [0], [1], [0, 0, 1, 1], [], []>} : vector<2x2048xf32>, vector<2048x32xf32>, vector<2x32xf32> -> vector<2x32xf32>
    %59 = vector.broadcast %56 : vector<1x32xf32> to vector<2x32xf32>
    %60 = arith.addf %58, %59 : vector<2x32xf32>
    %cst_15 = arith.constant 0.000000e+00 : f32
    %61 = vector.broadcast %cst_15 : f32 to vector<2x32xf32>
    %62 = arith.maximumf %60, %61 : vector<2x32xf32>
    %c400 = arith.constant 400 : index
    %c0_16 = arith.constant 0 : index
    %63 = vector.load %arg1[%c400, %c0_16] : memref<440x128xf32, #tpu.memory_space<vmem>>, vector<32x10xf32>
    %c432 = arith.constant 432 : index
    %c0_17 = arith.constant 0 : index
    %64 = vector.load %arg1[%c432, %c0_17] : memref<440x128xf32, #tpu.memory_space<vmem>>, vector<1x10xf32>
    %cst_18 = arith.constant dense<0.000000e+00> : vector<2x10xf32>
    %65 = tpu.matmul %62, %63, %cst_18 {dimension_numbers = #tpu.dot_dimension_numbers<[1], [0], [0], [1], [0, 0, 1, 1], [], []>} : vector<2x32xf32>, vector<32x10xf32>, vector<2x10xf32> -> vector<2x10xf32>
    %66 = vector.broadcast %64 : vector<1x10xf32> to vector<2x10xf32>
    %67 = arith.addf %65, %66 : vector<2x10xf32>
    %c0_19 = arith.constant 0 : index
    %c0_20 = arith.constant 0 : index
    %68 = vector.load %arg3[%c0_19, %c0_20] : memref<2x10xf32, #tpu.memory_space<vmem>>, vector<2x10xf32>
    tpu.vector_store %arg3[%c0_19, %c0_20], %67 {strides = array<i32>} : memref<2x10xf32, #tpu.memory_space<vmem>>, vector<2x10xf32>,
    return
  }
}

</mosaic_0001>

<llo_original>
// kernel: _fused_forward.1
$region0: #{_fused_forward.1}
  #allocation0 [shape = 'u32[]', space=smem, size = 0x4, offset = 0x4, fixed_abs, tag = 'smem constant byte address 0x4 - core index']
  #allocation1 [shape = 'u32[144,128]{1,0:T(1,128)}', space=vmem, size = 0x12000, scoped, tag = 'internal scratch']
  %s0 = inlined_call_operand.vmem [shape: f32[2,18,128], index: 0, kind: input, shape index: {}]
  %s1 = inlined_call_operand.vmem [shape: f32[440,128], index: 1, kind: input, shape index: {}]
  %s2 = inlined_call_operand.vmem [shape: f32[2048,32], index: 2, kind: input, shape index: {}]
  %s3 = inlined_call_operand.hbm [shape: f32[2,10], index: 3, kind: output, shape index: {}]
  %s4 = sld [smem:[#allocation0]]
  $region22: #{_fused_forward.1} parent=0
    _
  %s6 = ssub.s32 1, %s4
  %s7 = scalar_select 0, %s6, %s4
  $region1: #{_fused_forward.1} parent=0
    #allocation2 [shape = 'u8[1024]{0}', space=vmem, size = 0x400, scoped, tag = 'output window, operand 0, single buffered']
    #allocation3 [shape = 's32[1]{0}', space=sflag, size = 0x4, scoped, tag = 'scoped memory for _fused_forward.1']
    %8 = vsyncpa [#allocation3], 0
    // Predicated region
    $region2: #{_fused_forward.1} parent=1 // pred_check
      _
    $region3: #{_fused_forward.1} parent=1 // pred_check_branch
      %10 = sbr.rel (0) target = $region5
    $region4: #{_fused_forward.1} parent=1 // pred_region
      _
    $region5: #{_fused_forward.1} parent=1 // pred_fallthru
      _
    // Predicated region
    $region6: #{_fused_forward.1} parent=1 // pred_check
      _
    $region7: #{_fused_forward.1} parent=1 // pred_check_branch
      %12 = sbr.rel (0) target = $region9
    $region8: #{_fused_forward.1} parent=1 // pred_region
      _
    $region9: #{_fused_forward.1} parent=1 // pred_fallthru
      _
    // Predicated region
    $region10: #{_fused_forward.1} parent=1 // pred_check
      _
    $region11: #{_fused_forward.1} parent=1 // pred_check_branch
      %14 = sbr.rel (0) target = $region13
    $region12: #{_fused_forward.1} parent=1 // pred_region
      _
    $region13: #{_fused_forward.1} parent=1 // pred_fallthru
      _
    %v15 = vld [vmem:[%s0] sm:$0xff]
    %v16 = vld [vmem:[%s0 + $0x8] sm:$0xff]
    %v17 = vld [vmem:[%s0 + $0x10] sm:$0x3]
    %v18 = vld [vmem:[%s0 + $0x18] sm:$0xff]
    %v19 = vld [vmem:[%s0 + $0x20] sm:$0xff]
    %v20 = vld [vmem:[%s0 + $0x28] sm:$0x3]
    %v21 = vld [vmem:[%s1] sm:$0xff]
    %v22 = vld [vmem:[%s1 + $0x8] sm:$0xff]
    %v23 = vld [vmem:[%s1 + $0x10] sm:$0xff]
    %v24 = vld [vmem:[%s1 + $0x18] sm:$0xff]
    %v25 = vld [vmem:[%s1 + $0x20] sm:$0xff]
    %v26 = vld [vmem:[%s1 + $0x28] sm:$0xff]
    %v27 = vld [vmem:[%s1 + $0x30] sm:$0xff]
    %v28 = vld [vmem:[%s1 + $0x38] sm:$0xff]
    %v29 = vld [vmem:[%s1 + $0x40] sm:$0xff]
    %v30 = vld [vmem:[%s1 + $0x48] sm:$0xff]
    %v31 = vld [vmem:[%s1 + $0x50] sm:$0xff]
    %v32 = vld [vmem:[%s1 + $0x58] sm:$0xff]
    %v33 = vld [vmem:[%s1 + $0x60] sm:$0xff]
    %v34 = vld [vmem:[%s1 + $0x68] sm:$0xff]
    %v35 = vld [vmem:[%s1 + $0x70] sm:$0xff]
    %v36 = vld [vmem:[%s1 + $0x78] sm:$0xff]
    %vm43 = vcmask 1046528
    %v44 = vrot.slane %v15, 1
    %v45 = vrot.slane %v16, 1
    %v46 = vsel %vm43, %v44, %v45
    %v47 = vrot.slane %v17, 1
    %v48 = vsel %vm43, %v45, %v47
    %v49 = vrot.slane %v18, 1
    %v50 = vrot.slane %v19, 1
    %v51 = vsel %vm43, %v49, %v50
    %v52 = vrot.slane %v20, 1
    %v53 = vsel %vm43, %v50, %v52
    %v58 = vld [vmem:[%s1 + $0x80] sm:$0xff]
    %v59 = vld [vmem:[%s1 + $0x88] sm:$0xff]
    %v60 = vld [vmem:[%s1 + $0x90] sm:$0xff]
    %v61 = vld [vmem:[%s1 + $0x98] sm:$0xff]
    %v62 = vld [vmem:[%s1 + $0xa0] sm:$0xff]
    %v63 = vld [vmem:[%s1 + $0xa8] sm:$0xff]
    %v64 = vld [vmem:[%s1 + $0xb0] sm:$0xff]
    %v65 = vld [vmem:[%s1 + $0xb8] sm:$0xff]
    %v66 = vld [vmem:[%s1 + $0xc0] sm:$0xff]
    %v67 = vld [vmem:[%s1 + $0xc8] sm:$0xff]
    %v68 = vld [vmem:[%s1 + $0xd0] sm:$0xff]
    %v69 = vld [vmem:[%s1 + $0xd8] sm:$0xff]
    %v70 = vld [vmem:[%s1 + $0xe0] sm:$0xff]
    %v71 = vld [vmem:[%s1 + $0xe8] sm:$0xff]
    %v72 = vld [vmem:[%s1 + $0xf0] sm:$0xff]
    %v73 = vld [vmem:[%s1 + $0xf8] sm:$0xff]
    %74 = vmatprep.subr.mxu0 0.0
    %75 = vmatpush1.msra.mxu0 %v73
    %76 = vmatprep.subr.mxu0 0.0
    %77 = vmatpush1.msra.mxu0 %v72
    %78 = vmatprep.subr.mxu0 0.0
    %79 = vmatpush1.msra.mxu0 %v71
    %80 = vmatprep.subr.mxu0 0.0
    %81 = vmatpush1.msra.mxu0 %v70
    %82 = vmatprep.subr.mxu0 0.0
    %83 = vmatpush1.msra.mxu0 %v69
    %84 = vmatprep.subr.mxu0 0.0
    %85 = vmatpush1.msra.mxu0 %v68
    %86 = vmatprep.subr.mxu0 0.0
    %87 = vmatpush1.msra.mxu0 %v67
    %88 = vmatprep.subr.mxu0 0.0
    %89 = vmatpush1.msra.mxu0 %v66
    %90 = vmatprep.subr.mxu0 0.0
    %91 = vmatpush1.msra.mxu0 %v65
    %92 = vmatprep.subr.mxu0 0.0
    %93 = vmatpush1.msra.mxu0 %v64
    %94 = vmatprep.subr.mxu0 0.0
    %95 = vmatpush1.msra.mxu0 %v63
    %96 = vmatprep.subr.mxu0 0.0
    %97 = vmatpush1.msra.mxu0 %v62
    %98 = vmatprep.subr.mxu0 0.0
    %99 = vmatpush1.msra.mxu0 %v61
    %100 = vmatprep.subr.mxu0 0.0
    %101 = vmatpush1.msra.mxu0 %v60
    %102 = vmatprep.subr.mxu0 0.0
    %103 = vmatpush1.msra.mxu0 %v59
    %104 = vmatprep.subr.mxu0 0.0
    %105 = vmatpush1.msra.mxu0 %v58
    %106 = vmatprep.subr.mxu0 0.0
    %107 = vmatpush2.msra.mxu0 0.0
    %108 = vmatprep.subr.mxu0 0.0
    %109 = vmatpush2.msra.mxu0 0.0
    %110 = vmatprep.subr.mxu0 0.0
    %111 = vmatpush2.msra.mxu0 0.0
    %112 = vmatprep.subr.mxu0 0.0
    %113 = vmatpush2.msra.mxu0 0.0
    %114 = vmatprep.subr.mxu0 0.0
    %115 = vmatpush2.msra.mxu0 0.0
    %116 = vmatprep.subr.mxu0 0.0
    %117 = vmatpush2.msra.mxu0 0.0
    %118 = vmatprep.subr.mxu0 0.0
    %119 = vmatpush2.msra.mxu0 0.0
    %120 = vmatprep.subr.mxu0 0.0
    %121 = vmatpush2.msra.mxu0 0.0
    %122 = vmatprep.subr.mxu0 0.0
    %123 = vmatpush2.msra.mxu0 0.0
    %124 = vmatprep.subr.mxu0 0.0
    %125 = vmatpush2.msra.mxu0 0.0
    %126 = vmatprep.subr.mxu0 0.0
    %127 = vmatpush2.msra.mxu0 0.0
    %128 = vmatprep.subr.mxu0 0.0
    %129 = vmatpush2.msra.mxu0 0.0
    %130 = vmatprep.subr.mxu0 0.0
    %131 = vmatpush2.msra.mxu0 0.0
    %132 = vmatprep.subr.mxu0 0.0
    %133 = vmatpush2.msra.mxu0 0.0
    %134 = vmatprep.subr.mxu0 0.0
    %135 = vmatpush2.msra.mxu0 0.0
    %136 = vmatprep.subr.mxu0 0.0
    %137 = vmatpush2.msra.mxu0 0.0
    %138 = vmatprep.mubr.f32.mxu0 0.0
    %139 = vmatmul.mubr.f32.gmra.mxu0 %v46
    %v140 = vpop.f32.mrf.mxu0
    %v141 = vadd.f32 0.0, %v140
    %v142 = vpop.f32.mrf.mxu0
    %143 = vmatprep.mubr.f32.mxu0 0.0
    %144 = vmatmul.mubr.f32.gmra.mxu0 %v48
    %v145 = vpop.f32.mrf.mxu0
    %v146 = vadd.f32 0.0, %v145
    %v147 = vpop.f32.mrf.mxu0
    %148 = vmatprep.mubr.f32.mxu0 0.0
    %149 = vmatmul.mubr.f32.gmra.mxu0 %v51
    %v150 = vpop.f32.mrf.mxu0
    %v151 = vadd.f32 0.0, %v150
    %v152 = vpop.f32.mrf.mxu0
    %153 = vmatprep.mubr.f32.mxu0 0.0
    %154 = vmatmul.mubr.f32.gmra.mxu0 %v53
    %v155 = vpop.f32.mrf.mxu0
    %v156 = vadd.f32 0.0, %v155
    %v157 = vpop.f32.mrf.mxu0
    %158 = vdwg.mxu0
    %159 = vmatprep.subr.mxu0 0.0
    %160 = vmatpush1.msra.mxu0 %v36
    %161 = vmatprep.subr.mxu0 0.0
    %162 = vmatpush1.msra.mxu0 %v35
    %163 = vmatprep.subr.mxu0 0.0
    %164 = vmatpush1.msra.mxu0 %v34
    %165 = vmatprep.subr.mxu0 0.0
    %166 = vmatpush1.msra.mxu0 %v33
    %167 = vmatprep.subr.mxu0 0.0
    %168 = vmatpush1.msra.mxu0 %v32
    %169 = vmatprep.subr.mxu0 0.0
    %170 = vmatpush1.msra.mxu0 %v31
    %171 = vmatprep.subr.mxu0 0.0
    %172 = vmatpush1.msra.mxu0 %v30
    %173 = vmatprep.subr.mxu0 0.0
    %174 = vmatpush1.msra.mxu0 %v29
    %175 = vmatprep.subr.mxu0 0.0
    %176 = vmatpush1.msra.mxu0 %v28
    %177 = vmatprep.subr.mxu0 0.0
    %178 = vmatpush1.msra.mxu0 %v27
    %179 = vmatprep.subr.mxu0 0.0
    %180 = vmatpush1.msra.mxu0 %v26
    %181 = vmatprep.subr.mxu0 0.0
    %182 = vmatpush1.msra.mxu0 %v25
    %183 = vmatprep.subr.mxu0 0.0
    %184 = vmatpush1.msra.mxu0 %v24
    %185 = vmatprep.subr.mxu0 0.0
    %186 = vmatpush1.msra.mxu0 %v23
    %187 = vmatprep.subr.mxu0 0.0
    %188 = vmatpush1.msra.mxu0 %v22
    %189 = vmatprep.subr.mxu0 0.0
    %190 = vmatpush1.msra.mxu0 %v21
    %191 = vmatprep.subr.mxu0 0.0
    %192 = vmatpush2.msra.mxu0 0.0
    %193 = vmatprep.subr.mxu0 0.0
    %194 = vmatpush2.msra.mxu0 0.0
    %195 = vmatprep.subr.mxu0 0.0
    %196 = vmatpush2.msra.mxu0 0.0
    %197 = vmatprep.subr.mxu0 0.0
    %198 = vmatpush2.msra.mxu0 0.0
    %199 = vmatprep.subr.mxu0 0.0
    %200 = vmatpush2.msra.mxu0 0.0
    %201 = vmatprep.subr.mxu0 0.0
    %202 = vmatpush2.msra.mxu0 0.0
    %203 = vmatprep.subr.mxu0 0.0
    %204 = vmatpush2.msra.mxu0 0.0
    %205 = vmatprep.subr.mxu0 0.0
    %206 = vmatpush2.msra.mxu0 0.0
    %207 = vmatprep.subr.mxu0 0.0
    %208 = vmatpush2.msra.mxu0 0.0
    %209 = vmatprep.subr.mxu0 0.0
    %210 = vmatpush2.msra.mxu0 0.0
    %211 = vmatprep.subr.mxu0 0.0
    %212 = vmatpush2.msra.mxu0 0.0
    %213 = vmatprep.subr.mxu0 0.0
    %214 = vmatpush2.msra.mxu0 0.0
    %215 = vmatprep.subr.mxu0 0.0
    %216 = vmatpush2.msra.mxu0 0.0
    %217 = vmatprep.subr.mxu0 0.0
    %218 = vmatpush2.msra.mxu0 0.0
    %219 = vmatprep.subr.mxu0 0.0
    %220 = vmatpush2.msra.mxu0 0.0
    %221 = vmatprep.subr.mxu0 0.0
    %222 = vmatpush2.msra.mxu0 0.0
    %223 = vmatprep.mubr.f32.mxu0 0.0
    %224 = vmatmul.mubr.f32.gmra.mxu0 %v15
    %v225 = vpop.f32.mrf.mxu0
    %v226 = vadd.f32 %v141, %v225
    %v227 = vpop.f32.mrf.mxu0
    %228 = vmatprep.mubr.f32.mxu0 0.0
    %229 = vmatmul.mubr.f32.gmra.mxu0 %v16
    %v230 = vpop.f32.mrf.mxu0
    %v231 = vadd.f32 %v146, %v230
    %v232 = vpop.f32.mrf.mxu0
    %233 = vmatprep.mubr.f32.mxu0 0.0
    %234 = vmatmul.mubr.f32.gmra.mxu0 %v18
    %v235 = vpop.f32.mrf.mxu0
    %v236 = vadd.f32 %v151, %v235
    %v237 = vpop.f32.mrf.mxu0
    %238 = vmatprep.mubr.f32.mxu0 0.0
    %239 = vmatmul.mubr.f32.gmra.mxu0 %v19
    %v240 = vpop.f32.mrf.mxu0
    %v241 = vadd.f32 %v156, %v240
    %v242 = vpop.f32.mrf.mxu0
    %243 = vdwg.mxu0
    %vm244 = vcmask 1045504
    %v245 = vrot.slane %v15, 2
    %v246 = vrot.slane %v16, 2
    %v247 = vsel %vm244, %v245, %v246
    %v248 = vrot.slane %v17, 2
    %v249 = vsel %vm244, %v246, %v248
    %v250 = vrot.slane %v18, 2
    %v251 = vrot.slane %v19, 2
    %v252 = vsel %vm244, %v250, %v251
    %v253 = vrot.slane %v20, 2
    %v254 = vsel %vm244, %v251, %v253
    %v259 = vld [vmem:[%s1 + $0x100] sm:$0xff]
    %v260 = vld [vmem:[%s1 + $0x108] sm:$0xff]
    %v261 = vld [vmem:[%s1 + $0x110] sm:$0xff]
    %v262 = vld [vmem:[%s1 + $0x118] sm:$0xff]
    %v263 = vld [vmem:[%s1 + $0x120] sm:$0xff]
    %v264 = vld [vmem:[%s1 + $0x128] sm:$0xff]
    %v265 = vld [vmem:[%s1 + $0x130] sm:$0xff]
    %v266 = vld [vmem:[%s1 + $0x138] sm:$0xff]
    %v267 = vld [vmem:[%s1 + $0x140] sm:$0xff]
    %v268 = vld [vmem:[%s1 + $0x148] sm:$0xff]
    %v269 = vld [vmem:[%s1 + $0x150] sm:$0xff]
    %v270 = vld [vmem:[%s1 + $0x158] sm:$0xff]
    %v271 = vld [vmem:[%s1 + $0x160] sm:$0xff]
    %v272 = vld [vmem:[%s1 + $0x168] sm:$0xff]
    %v273 = vld [vmem:[%s1 + $0x170] sm:$0xff]
    %v274 = vld [vmem:[%s1 + $0x178] sm:$0xff]
    %275 = vmatprep.subr.mxu0 0.0
    %276 = vmatpush1.msra.mxu0 %v274
    %277 = vmatprep.subr.mxu0 0.0
    %278 = vmatpush1.msra.mxu0 %v273
    %279 = vmatprep.subr.mxu0 0.0
    %280 = vmatpush1.msra.mxu0 %v272
    %281 = vmatprep.subr.mxu0 0.0
    %282 = vmatpush1.msra.mxu0 %v271
    %283 = vmatprep.subr.mxu0 0.0
    %284 = vmatpush1.msra.mxu0 %v270
    %285 = vmatprep.subr.mxu0 0.0
    %286 = vmatpush1.msra.mxu0 %v269
    %287 = vmatprep.subr.mxu0 0.0
    %288 = vmatpush1.msra.mxu0 %v268
    %289 = vmatprep.subr.mxu0 0.0
    %290 = vmatpush1.msra.mxu0 %v267
    %291 = vmatprep.subr.mxu0 0.0
    %292 = vmatpush1.msra.mxu0 %v266
    %293 = vmatprep.subr.mxu0 0.0
    %294 = vmatpush1.msra.mxu0 %v265
    %295 = vmatprep.subr.mxu0 0.0
    %296 = vmatpush1.msra.mxu0 %v264
    %297 = vmatprep.subr.mxu0 0.0
    %298 = vmatpush1.msra.mxu0 %v263
    %299 = vmatprep.subr.mxu0 0.0
    %300 = vmatpush1.msra.mxu0 %v262
    %301 = vmatprep.subr.mxu0 0.0
    %302 = vmatpush1.msra.mxu0 %v261
    %303 = vmatprep.subr.mxu0 0.0
    %304 = vmatpush1.msra.mxu0 %v260
    %305 = vmatprep.subr.mxu0 0.0
    %306 = vmatpush1.msra.mxu0 %v259
    %307 = vmatprep.subr.mxu0 0.0
    %308 = vmatpush2.msra.mxu0 0.0
    %309 = vmatprep.subr.mxu0 0.0
    %310 = vmatpush2.msra.mxu0 0.0
    %311 = vmatprep.subr.mxu0 0.0
    %312 = vmatpush2.msra.mxu0 0.0
    %313 = vmatprep.subr.mxu0 0.0
    %314 = vmatpush2.msra.mxu0 0.0
    %315 = vmatprep.subr.mxu0 0.0
    %316 = vmatpush2.msra.mxu0 0.0
    %317 = vmatprep.subr.mxu0 0.0
    %318 = vmatpush2.msra.mxu0 0.0
    %319 = vmatprep.subr.mxu0 0.0
    %320 = vmatpush2.msra.mxu0 0.0
    %321 = vmatprep.subr.mxu0 0.0
    %322 = vmatpush2.msra.mxu0 0.0
    %323 = vmatprep.subr.mxu0 0.0
    %324 = vmatpush2.msra.mxu0 0.0
    %325 = vmatprep.subr.mxu0 0.0
    %326 = vmatpush2.msra.mxu0 0.0
    %327 = vmatprep.subr.mxu0 0.0
    %328 = vmatpush2.msra.mxu0 0.0
    %329 = vmatprep.subr.mxu0 0.0
    %330 = vmatpush2.msra.mxu0 0.0
    %331 = vmatprep.subr.mxu0 0.0
    %332 = vmatpush2.msra.mxu0 0.0
    %333 = vmatprep.subr.mxu0 0.0
    %334 = vmatpush2.msra.mxu0 0.0
    %335 = vmatprep.subr.mxu0 0.0
    %336 = vmatpush2.msra.mxu0 0.0
    %337 = vmatprep.subr.mxu0 0.0
    %338 = vmatpush2.msra.mxu0 0.0
    %339 = vmatprep.mubr.f32.mxu0 0.0
    %340 = vmatmul.mubr.f32.gmra.mxu0 %v247
    %v341 = vpop.f32.mrf.mxu0
    %v342 = vadd.f32 0.0, %v341
    %v343 = vpop.f32.mrf.mxu0
    %344 = vmatprep.mubr.f32.mxu0 0.0
    %345 = vmatmul.mubr.f32.gmra.mxu0 %v249
    %v346 = vpop.f32.mrf.mxu0
    %v347 = vadd.f32 0.0, %v346
    %v348 = vpop.f32.mrf.mxu0
    %349 = vmatprep.mubr.f32.mxu0 0.0
    %350 = vmatmul.mubr.f32.gmra.mxu0 %v252
    %v351 = vpop.f32.mrf.mxu0
    %v352 = vadd.f32 0.0, %v351
    %v353 = vpop.f32.mrf.mxu0
    %354 = vmatprep.mubr.f32.mxu0 0.0
    %355 = vmatmul.mubr.f32.gmra.mxu0 %v254
    %v356 = vpop.f32.mrf.mxu0
    %v357 = vadd.f32 0.0, %v356
    %v358 = vpop.f32.mrf.mxu0
    %359 = vdwg.mxu0
    %v360 = vadd.f32 %v226, %v342
    %v361 = vadd.f32 %v231, %v347
    %v362 = vadd.f32 %v236, %v352
    %v363 = vadd.f32 %v241, %v357
    %v364 = vld [vmem:[%s1 + $0x180] sm:$0x1]
    %v365 = vlaneseq
    %v366 = vshrl.u32 %v365, 7
    %v367 = vsub.s32 0, %v366
    %v368 = vrot.slane %v364, %v367
    %v369 = vadd.f32 %v360, %v368
    %v370 = vadd.f32 %v361, %v368
    %v371 = vadd.f32 %v362, %v368
    %v372 = vadd.f32 %v363, %v368
    %v373 = vmax.f32 %v369, 0.0
    %v374 = vmax.f32 %v370, 0.0
    %v375 = vmax.f32 %v371, 0.0
    %v376 = vmax.f32 %v372, 0.0
    %v379 = vrot.slane %v375, 7
    %vm380 = vcmask 1041409
    %v381 = vsel %vm380, %v379, %v373
    %v383 = vrot.slane %v373, 1
    %v384 = vsel %vm380, %v375, %v383
    %v386 = vrot.slane %v373, 2
    %v387 = vrot.slane %v375, 1
    %v388 = vsel %vm380, %v387, %v386
    %v390 = vrot.slane %v373, 3
    %v391 = vrot.slane %v375, 2
    %v392 = vsel %vm380, %v391, %v390
    %v394 = vrot.slane %v373, 4
    %v395 = vrot.slane %v375, 3
    %v396 = vsel %vm380, %v395, %v394
    %v398 = vrot.slane %v373, 5
    %v399 = vrot.slane %v375, 4
    %v400 = vsel %vm380, %v399, %v398
    %v402 = vrot.slane %v373, 6
    %v403 = vrot.slane %v375, 5
    %v404 = vsel %vm380, %v403, %v402
    %v406 = vrot.slane %v373, 7
    %v407 = vrot.slane %v375, 6
    %v408 = vsel %vm380, %v407, %v406
    %v412 = vrot.slane %v376, 7
    %v413 = vsel %vm380, %v412, %v374
    %v415 = vrot.slane %v374, 1
    %v416 = vsel %vm380, %v376, %v415
    %v418 = vrot.slane %v374, 2
    %v419 = vrot.slane %v376, 1
    %v420 = vsel %vm380, %v419, %v418
    %v422 = vrot.slane %v374, 3
    %v423 = vrot.slane %v376, 2
    %v424 = vsel %vm380, %v423, %v422
    %v426 = vrot.slane %v374, 4
    %v427 = vrot.slane %v376, 3
    %v428 = vsel %vm380, %v427, %v426
    %v430 = vrot.slane %v374, 5
    %v431 = vrot.slane %v376, 4
    %v432 = vsel %vm380, %v431, %v430
    %v434 = vrot.slane %v374, 6
    %v435 = vrot.slane %v376, 5
    %v436 = vsel %vm380, %v435, %v434
    %v438 = vrot.slane %v374, 7
    %v439 = vrot.slane %v376, 6
    %v440 = vsel %vm380, %v439, %v438
    %v442 = vld [vmem:[%s1 + $0x188] sm:$0x1]
    %v443 = vld [vmem:[%s2] sm:$0xff]
    %v444 = vld [vmem:[%s2 + $0x8] sm:$0xff]
    %v445 = vld [vmem:[%s2 + $0x10] sm:$0xff]
    %v446 = vld [vmem:[%s2 + $0x18] sm:$0xff]
    %v447 = vld [vmem:[%s2 + $0x20] sm:$0xff]
    %v448 = vld [vmem:[%s2 + $0x28] sm:$0xff]
    %v449 = vld [vmem:[%s2 + $0x30] sm:$0xff]
    %v450 = vld [vmem:[%s2 + $0x38] sm:$0xff]
    %v451 = vld [vmem:[%s2 + $0x40] sm:$0xff]
    %v452 = vld [vmem:[%s2 + $0x48] sm:$0xff]
    %v453 = vld [vmem:[%s2 + $0x50] sm:$0xff]
    %v454 = vld [vmem:[%s2 + $0x58] sm:$0xff]
    %v455 = vld [vmem:[%s2 + $0x60] sm:$0xff]
    %v456 = vld [vmem:[%s2 + $0x68] sm:$0xff]
    %v457 = vld [vmem:[%s2 + $0x70] sm:$0xff]
    %v458 = vld [vmem:[%s2 + $0x78] sm:$0xff]
    %v459 = vld [vmem:[%s2 + $0x80] sm:$0xff]
    %v460 = vld [vmem:[%s2 + $0x88] sm:$0xff]
    %v461 = vld [vmem:[%s2 + $0x90] sm:$0xff]
    %v462 = vld [vmem:[%s2 + $0x98] sm:$0xff]
    %v463 = vld [vmem:[%s2 + $0xa0] sm:$0xff]
    %v464 = vld [vmem:[%s2 + $0xa8] sm:$0xff]
    %v465 = vld [vmem:[%s2 + $0xb0] sm:$0xff]
    %v466 = vld [vmem:[%s2 + $0xb8] sm:$0xff]
    %v467 = vld [vmem:[%s2 + $0xc0] sm:$0xff]
    %v468 = vld [vmem:[%s2 + $0xc8] sm:$0xff]
    %v469 = vld [vmem:[%s2 + $0xd0] sm:$0xff]
    %v470 = vld [vmem:[%s2 + $0xd8] sm:$0xff]
    %v471 = vld [vmem:[%s2 + $0xe0] sm:$0xff]
    %v472 = vld [vmem:[%s2 + $0xe8] sm:$0xff]
    %v473 = vld [vmem:[%s2 + $0xf0] sm:$0xff]
    %v474 = vld [vmem:[%s2 + $0xf8] sm:$0xff]
    %v475 = vld [vmem:[%s2 + $0x100] sm:$0xff]
    %v476 = vld [vmem:[%s2 + $0x108] sm:$0xff]
    %v477 = vld [vmem:[%s2 + $0x110] sm:$0xff]
    %v478 = vld [vmem:[%s2 + $0x118] sm:$0xff]
    %v479 = vld [vmem:[%s2 + $0x120] sm:$0xff]
    %v480 = vld [vmem:[%s2 + $0x128] sm:$0xff]
    %v481 = vld [vmem:[%s2 + $0x130] sm:$0xff]
    %v482 = vld [vmem:[%s2 + $0x138] sm:$0xff]
    %v483 = vld [vmem:[%s2 + $0x140] sm:$0xff]
    %v484 = vld [vmem:[%s2 + $0x148] sm:$0xff]
    %v485 = vld [vmem:[%s2 + $0x150] sm:$0xff]
    %v486 = vld [vmem:[%s2 + $0x158] sm:$0xff]
    %v487 = vld [vmem:[%s2 + $0x160] sm:$0xff]
    %v488 = vld [vmem:[%s2 + $0x168] sm:$0xff]
    %v489 = vld [vmem:[%s2 + $0x170] sm:$0xff]
    %v490 = vld [vmem:[%s2 + $0x178] sm:$0xff]
    %v491 = vld [vmem:[%s2 + $0x180] sm:$0xff]
    %v492 = vld [vmem:[%s2 + $0x188] sm:$0xff]
    %v493 = vld [vmem:[%s2 + $0x190] sm:$0xff]
    %v494 = vld [vmem:[%s2 + $0x198] sm:$0xff]
    %v495 = vld [vmem:[%s2 + $0x1a0] sm:$0xff]
    %v496 = vld [vmem:[%s2 + $0x1a8] sm:$0xff]
    %v497 = vld [vmem:[%s2 + $0x1b0] sm:$0xff]
    %v498 = vld [vmem:[%s2 + $0x1b8] sm:$0xff]
    %v499 = vld [vmem:[%s2 + $0x1c0] sm:$0xff]
    %v500 = vld [vmem:[%s2 + $0x1c8] sm:$0xff]
    %v501 = vld [vmem:[%s2 + $0x1d0] sm:$0xff]
    %v502 = vld [vmem:[%s2 + $0x1d8] sm:$0xff]
    %v503 = vld [vmem:[%s2 + $0x1e0] sm:$0xff]
    %v504 = vld [vmem:[%s2 + $0x1e8] sm:$0xff]
    %v505 = vld [vmem:[%s2 + $0x1f0] sm:$0xff]
    %v506 = vld [vmem:[%s2 + $0x1f8] sm:$0xff]
    %v507 = vld [vmem:[%s2 + $0x200] sm:$0xff]
    %v508 = vld [vmem:[%s2 + $0x208] sm:$0xff]
    %v509 = vld [vmem:[%s2 + $0x210] sm:$0xff]
    %v510 = vld [vmem:[%s2 + $0x218] sm:$0xff]
    %v511 = vld [vmem:[%s2 + $0x220] sm:$0xff]
    %v512 = vld [vmem:[%s2 + $0x228] sm:$0xff]
    %v513 = vld [vmem:[%s2 + $0x230] sm:$0xff]
    %v514 = vld [vmem:[%s2 + $0x238] sm:$0xff]
    %v515 = vld [vmem:[%s2 + $0x240] sm:$0xff]
    %v516 = vld [vmem:[%s2 + $0x248] sm:$0xff]
    %v517 = vld [vmem:[%s2 + $0x250] sm:$0xff]
    %v518 = vld [vmem:[%s2 + $0x258] sm:$0xff]
    %v519 = vld [vmem:[%s2 + $0x260] sm:$0xff]
    %v520 = vld [vmem:[%s2 + $0x268] sm:$0xff]
    %v521 = vld [vmem:[%s2 + $0x270] sm:$0xff]
    %v522 = vld [vmem:[%s2 + $0x278] sm:$0xff]
    %v523 = vld [vmem:[%s2 + $0x280] sm:$0xff]
    %v524 = vld [vmem:[%s2 + $0x288] sm:$0xff]
    %v525 = vld [vmem:[%s2 + $0x290] sm:$0xff]
    %v526 = vld [vmem:[%s2 + $0x298] sm:$0xff]
    %v527 = vld [vmem:[%s2 + $0x2a0] sm:$0xff]
    %v528 = vld [vmem:[%s2 + $0x2a8] sm:$0xff]
    %v529 = vld [vmem:[%s2 + $0x2b0] sm:$0xff]
    %v530 = vld [vmem:[%s2 + $0x2b8] sm:$0xff]
    %v531 = vld [vmem:[%s2 + $0x2c0] sm:$0xff]
    %v532 = vld [vmem:[%s2 + $0x2c8] sm:$0xff]
    %v533 = vld [vmem:[%s2 + $0x2d0] sm:$0xff]
    %v534 = vld [vmem:[%s2 + $0x2d8] sm:$0xff]
    %v535 = vld [vmem:[%s2 + $0x2e0] sm:$0xff]
    %v536 = vld [vmem:[%s2 + $0x2e8] sm:$0xff]
    %v537 = vld [vmem:[%s2 + $0x2f0] sm:$0xff]
    %v538 = vld [vmem:[%s2 + $0x2f8] sm:$0xff]
    %v539 = vld [vmem:[%s2 + $0x300] sm:$0xff]
    %v540 = vld [vmem:[%s2 + $0x308] sm:$0xff]
    %v541 = vld [vmem:[%s2 + $0x310] sm:$0xff]
    %v542 = vld [vmem:[%s2 + $0x318] sm:$0xff]
    %v543 = vld [vmem:[%s2 + $0x320] sm:$0xff]
    %v544 = vld [vmem:[%s2 + $0x328] sm:$0xff]
    %v545 = vld [vmem:[%s2 + $0x330] sm:$0xff]
    %v546 = vld [vmem:[%s2 + $0x338] sm:$0xff]
    %v547 = vld [vmem:[%s2 + $0x340] sm:$0xff]
    %v548 = vld [vmem:[%s2 + $0x348] sm:$0xff]
    %v549 = vld [vmem:[%s2 + $0x350] sm:$0xff]
    %v550 = vld [vmem:[%s2 + $0x358] sm:$0xff]
    %v551 = vld [vmem:[%s2 + $0x360] sm:$0xff]
    %v552 = vld [vmem:[%s2 + $0x368] sm:$0xff]
    %v553 = vld [vmem:[%s2 + $0x370] sm:$0xff]
    %v554 = vld [vmem:[%s2 + $0x378] sm:$0xff]
    %v555 = vld [vmem:[%s2 + $0x380] sm:$0xff]
    %v556 = vld [vmem:[%s2 + $0x388] sm:$0xff]
    %v557 = vld [vmem:[%s2 + $0x390] sm:$0xff]
    %v558 = vld [vmem:[%s2 + $0x398] sm:$0xff]
    %v559 = vld [vmem:[%s2 + $0x3a0] sm:$0xff]
    %v560 = vld [vmem:[%s2 + $0x3a8] sm:$0xff]
    %v561 = vld [vmem:[%s2 + $0x3b0] sm:$0xff]
    %v562 = vld [vmem:[%s2 + $0x3b8] sm:$0xff]
    %v563 = vld [vmem:[%s2 + $0x3c0] sm:$0xff]
    %v564 = vld [vmem:[%s2 + $0x3c8] sm:$0xff]
    %v565 = vld [vmem:[%s2 + $0x3d0] sm:$0xff]
    %v566 = vld [vmem:[%s2 + $0x3d8] sm:$0xff]
    %v567 = vld [vmem:[%s2 + $0x3e0] sm:$0xff]
    %v568 = vld [vmem:[%s2 + $0x3e8] sm:$0xff]
    %v569 = vld [vmem:[%s2 + $0x3f0] sm:$0xff]
    %v570 = vld [vmem:[%s2 + $0x3f8] sm:$0xff]
    %v571 = vld [vmem:[%s2 + $0x400] sm:$0xff]
    %v572 = vld [vmem:[%s2 + $0x408] sm:$0xff]
    %v573 = vld [vmem:[%s2 + $0x410] sm:$0xff]
    %v574 = vld [vmem:[%s2 + $0x418] sm:$0xff]
    %v575 = vld [vmem:[%s2 + $0x420] sm:$0xff]
    %v576 = vld [vmem:[%s2 + $0x428] sm:$0xff]
    %v577 = vld [vmem:[%s2 + $0x430] sm:$0xff]
    %v578 = vld [vmem:[%s2 + $0x438] sm:$0xff]
    %v579 = vld [vmem:[%s2 + $0x440] sm:$0xff]
    %v580 = vld [vmem:[%s2 + $0x448] sm:$0xff]
    %v581 = vld [vmem:[%s2 + $0x450] sm:$0xff]
    %v582 = vld [vmem:[%s2 + $0x458] sm:$0xff]
    %v583 = vld [vmem:[%s2 + $0x460] sm:$0xff]
    %v584 = vld [vmem:[%s2 + $0x468] sm:$0xff]
    %v585 = vld [vmem:[%s2 + $0x470] sm:$0xff]
    %v586 = vld [vmem:[%s2 + $0x478] sm:$0xff]
    %v587 = vld [vmem:[%s2 + $0x480] sm:$0xff]
    %v588 = vld [vmem:[%s2 + $0x488] sm:$0xff]
    %v589 = vld [vmem:[%s2 + $0x490] sm:$0xff]
    %v590 = vld [vmem:[%s2 + $0x498] sm:$0xff]
    %v591 = vld [vmem:[%s2 + $0x4a0] sm:$0xff]
    %v592 = vld [vmem:[%s2 + $0x4a8] sm:$0xff]
    %v593 = vld [vmem:[%s2 + $0x4b0] sm:$0xff]
    %v594 = vld [vmem:[%s2 + $0x4b8] sm:$0xff]
    %v595 = vld [vmem:[%s2 + $0x4c0] sm:$0xff]
    %v596 = vld [vmem:[%s2 + $0x4c8] sm:$0xff]
    %v597 = vld [vmem:[%s2 + $0x4d0] sm:$0xff]
    %v598 = vld [vmem:[%s2 + $0x4d8] sm:$0xff]
    %v599 = vld [vmem:[%s2 + $0x4e0] sm:$0xff]
    %v600 = vld [vmem:[%s2 + $0x4e8] sm:$0xff]
    %v601 = vld [vmem:[%s2 + $0x4f0] sm:$0xff]
    %v602 = vld [vmem:[%s2 + $0x4f8] sm:$0xff]
    %v603 = vld [vmem:[%s2 + $0x500] sm:$0xff]
    %v604 = vld [vmem:[%s2 + $0x508] sm:$0xff]
    %v605 = vld [vmem:[%s2 + $0x510] sm:$0xff]
    %v606 = vld [vmem:[%s2 + $0x518] sm:$0xff]
    %v607 = vld [vmem:[%s2 + $0x520] sm:$0xff]
    %v608 = vld [vmem:[%s2 + $0x528] sm:$0xff]
    %v609 = vld [vmem:[%s2 + $0x530] sm:$0xff]
    %v610 = vld [vmem:[%s2 + $0x538] sm:$0xff]
    %v611 = vld [vmem:[%s2 + $0x540] sm:$0xff]
    %v612 = vld [vmem:[%s2 + $0x548] sm:$0xff]
    %v613 = vld [vmem:[%s2 + $0x550] sm:$0xff]
    %v614 = vld [vmem:[%s2 + $0x558] sm:$0xff]
    %v615 = vld [vmem:[%s2 + $0x560] sm:$0xff]
    %v616 = vld [vmem:[%s2 + $0x568] sm:$0xff]
    %v617 = vld [vmem:[%s2 + $0x570] sm:$0xff]
    %v618 = vld [vmem:[%s2 + $0x578] sm:$0xff]
    %v619 = vld [vmem:[%s2 + $0x580] sm:$0xff]
    %v620 = vld [vmem:[%s2 + $0x588] sm:$0xff]
    %v621 = vld [vmem:[%s2 + $0x590] sm:$0xff]
    %v622 = vld [vmem:[%s2 + $0x598] sm:$0xff]
    %v623 = vld [vmem:[%s2 + $0x5a0] sm:$0xff]
    %v624 = vld [vmem:[%s2 + $0x5a8] sm:$0xff]
    %v625 = vld [vmem:[%s2 + $0x5b0] sm:$0xff]
    %v626 = vld [vmem:[%s2 + $0x5b8] sm:$0xff]
    %v627 = vld [vmem:[%s2 + $0x5c0] sm:$0xff]
    %v628 = vld [vmem:[%s2 + $0x5c8] sm:$0xff]
    %v629 = vld [vmem:[%s2 + $0x5d0] sm:$0xff]
    %v630 = vld [vmem:[%s2 + $0x5d8] sm:$0xff]
    %v631 = vld [vmem:[%s2 + $0x5e0] sm:$0xff]
    %v632 = vld [vmem:[%s2 + $0x5e8] sm:$0xff]
    %v633 = vld [vmem:[%s2 + $0x5f0] sm:$0xff]
    %v634 = vld [vmem:[%s2 + $0x5f8] sm:$0xff]
    %v635 = vld [vmem:[%s2 + $0x600] sm:$0xff]
    %v636 = vld [vmem:[%s2 + $0x608] sm:$0xff]
    %v637 = vld [vmem:[%s2 + $0x610] sm:$0xff]
    %v638 = vld [vmem:[%s2 + $0x618] sm:$0xff]
    %v639 = vld [vmem:[%s2 + $0x620] sm:$0xff]
    %v640 = vld [vmem:[%s2 + $0x628] sm:$0xff]
    %v641 = vld [vmem:[%s2 + $0x630] sm:$0xff]
    %v642 = vld [vmem:[%s2 + $0x638] sm:$0xff]
    %v643 = vld [vmem:[%s2 + $0x640] sm:$0xff]
    %v644 = vld [vmem:[%s2 + $0x648] sm:$0xff]
    %v645 = vld [vmem:[%s2 + $0x650] sm:$0xff]
    %v646 = vld [vmem:[%s2 + $0x658] sm:$0xff]
    %v647 = vld [vmem:[%s2 + $0x660] sm:$0xff]
    %v648 = vld [vmem:[%s2 + $0x668] sm:$0xff]
    %v649 = vld [vmem:[%s2 + $0x670] sm:$0xff]
    %v650 = vld [vmem:[%s2 + $0x678] sm:$0xff]
    %v651 = vld [vmem:[%s2 + $0x680] sm:$0xff]
    %v652 = vld [vmem:[%s2 + $0x688] sm:$0xff]
    %v653 = vld [vmem:[%s2 + $0x690] sm:$0xff]
    %v654 = vld [vmem:[%s2 + $0x698] sm:$0xff]
    %v655 = vld [vmem:[%s2 + $0x6a0] sm:$0xff]
    %v656 = vld [vmem:[%s2 + $0x6a8] sm:$0xff]
    %v657 = vld [vmem:[%s2 + $0x6b0] sm:$0xff]
    %v658 = vld [vmem:[%s2 + $0x6b8] sm:$0xff]
    %v659 = vld [vmem:[%s2 + $0x6c0] sm:$0xff]
    %v660 = vld [vmem:[%s2 + $0x6c8] sm:$0xff]
    %v661 = vld [vmem:[%s2 + $0x6d0] sm:$0xff]
    %v662 = vld [vmem:[%s2 + $0x6d8] sm:$0xff]
    %v663 = vld [vmem:[%s2 + $0x6e0] sm:$0xff]
    %v664 = vld [vmem:[%s2 + $0x6e8] sm:$0xff]
    %v665 = vld [vmem:[%s2 + $0x6f0] sm:$0xff]
    %v666 = vld [vmem:[%s2 + $0x6f8] sm:$0xff]
    %v667 = vld [vmem:[%s2 + $0x700] sm:$0xff]
    %v668 = vld [vmem:[%s2 + $0x708] sm:$0xff]
    %v669 = vld [vmem:[%s2 + $0x710] sm:$0xff]
    %v670 = vld [vmem:[%s2 + $0x718] sm:$0xff]
    %v671 = vld [vmem:[%s2 + $0x720] sm:$0xff]
    %v672 = vld [vmem:[%s2 + $0x728] sm:$0xff]
    %v673 = vld [vmem:[%s2 + $0x730] sm:$0xff]
    %v674 = vld [vmem:[%s2 + $0x738] sm:$0xff]
    %v675 = vld [vmem:[%s2 + $0x740] sm:$0xff]
    %v676 = vld [vmem:[%s2 + $0x748] sm:$0xff]
    %v677 = vld [vmem:[%s2 + $0x750] sm:$0xff]
    %v678 = vld [vmem:[%s2 + $0x758] sm:$0xff]
    %v679 = vld [vmem:[%s2 + $0x760] sm:$0xff]
    %v680 = vld [vmem:[%s2 + $0x768] sm:$0xff]
    %v681 = vld [vmem:[%s2 + $0x770] sm:$0xff]
    %v682 = vld [vmem:[%s2 + $0x778] sm:$0xff]
    %v683 = vld [vmem:[%s2 + $0x780] sm:$0xff]
    %v684 = vld [vmem:[%s2 + $0x788] sm:$0xff]
    %v685 = vld [vmem:[%s2 + $0x790] sm:$0xff]
    %v686 = vld [vmem:[%s2 + $0x798] sm:$0xff]
    %v687 = vld [vmem:[%s2 + $0x7a0] sm:$0xff]
    %v688 = vld [vmem:[%s2 + $0x7a8] sm:$0xff]
    %v689 = vld [vmem:[%s2 + $0x7b0] sm:$0xff]
    %v690 = vld [vmem:[%s2 + $0x7b8] sm:$0xff]
    %v691 = vld [vmem:[%s2 + $0x7c0] sm:$0xff]
    %v692 = vld [vmem:[%s2 + $0x7c8] sm:$0xff]
    %v693 = vld [vmem:[%s2 + $0x7d0] sm:$0xff]
    %v694 = vld [vmem:[%s2 + $0x7d8] sm:$0xff]
    %v695 = vld [vmem:[%s2 + $0x7e0] sm:$0xff]
    %v696 = vld [vmem:[%s2 + $0x7e8] sm:$0xff]
    %v697 = vld [vmem:[%s2 + $0x7f0] sm:$0xff]
    %v698 = vld [vmem:[%s2 + $0x7f8] sm:$0xff]
    %v699 = vlaneseq
    %v700 = vshrl.u32 %v699, 7
    %v701 = vsub.s32 0, %v700
    %v702 = vrot.slane %v442, %v701
    %703 = vmatprep.subr.mxu0 0.0
    %704 = vmatpush1.msra.mxu0 %v458
    %705 = vmatprep.subr.mxu0 0.0
    %706 = vmatpush1.msra.mxu0 %v457
    %707 = vmatprep.subr.mxu0 0.0
    %708 = vmatpush1.msra.mxu0 %v456
    %709 = vmatprep.subr.mxu0 0.0
    %710 = vmatpush1.msra.mxu0 %v455
    %711 = vmatprep.subr.mxu0 0.0
    %712 = vmatpush1.msra.mxu0 %v454
    %713 = vmatprep.subr.mxu0 0.0
    %714 = vmatpush1.msra.mxu0 %v453
    %715 = vmatprep.subr.mxu0 0.0
    %716 = vmatpush1.msra.mxu0 %v452
    %717 = vmatprep.subr.mxu0 0.0
    %718 = vmatpush1.msra.mxu0 %v451
    %719 = vmatprep.subr.mxu0 0.0
    %720 = vmatpush1.msra.mxu0 %v450
    %721 = vmatprep.subr.mxu0 0.0
    %722 = vmatpush1.msra.mxu0 %v449
    %723 = vmatprep.subr.mxu0 0.0
    %724 = vmatpush1.msra.mxu0 %v448
    %725 = vmatprep.subr.mxu0 0.0
    %726 = vmatpush1.msra.mxu0 %v447
    %727 = vmatprep.subr.mxu0 0.0
    %728 = vmatpush1.msra.mxu0 %v446
    %729 = vmatprep.subr.mxu0 0.0
    %730 = vmatpush1.msra.mxu0 %v445
    %731 = vmatprep.subr.mxu0 0.0
    %732 = vmatpush1.msra.mxu0 %v444
    %733 = vmatprep.subr.mxu0 0.0
    %734 = vmatpush1.msra.mxu0 %v443
    %735 = vmatprep.subr.mxu0 0.0
    %736 = vmatpush2.msra.mxu0 %v474
    %737 = vmatprep.subr.mxu0 0.0
    %738 = vmatpush2.msra.mxu0 %v473
    %739 = vmatprep.subr.mxu0 0.0
    %740 = vmatpush2.msra.mxu0 %v472
    %741 = vmatprep.subr.mxu0 0.0
    %742 = vmatpush2.msra.mxu0 %v471
    %743 = vmatprep.subr.mxu0 0.0
    %744 = vmatpush2.msra.mxu0 %v470
    %745 = vmatprep.subr.mxu0 0.0
    %746 = vmatpush2.msra.mxu0 %v469
    %747 = vmatprep.subr.mxu0 0.0
    %748 = vmatpush2.msra.mxu0 %v468
    %749 = vmatprep.subr.mxu0 0.0
    %750 = vmatpush2.msra.mxu0 %v467
    %751 = vmatprep.subr.mxu0 0.0
    %752 = vmatpush2.msra.mxu0 %v466
    %753 = vmatprep.subr.mxu0 0.0
    %754 = vmatpush2.msra.mxu0 %v465
    %755 = vmatprep.subr.mxu0 0.0
    %756 = vmatpush2.msra.mxu0 %v464
    %757 = vmatprep.subr.mxu0 0.0
    %758 = vmatpush2.msra.mxu0 %v463
    %759 = vmatprep.subr.mxu0 0.0
    %760 = vmatpush2.msra.mxu0 %v462
    %761 = vmatprep.subr.mxu0 0.0
    %762 = vmatpush2.msra.mxu0 %v461
    %763 = vmatprep.subr.mxu0 0.0
    %764 = vmatpush2.msra.mxu0 %v460
    %765 = vmatprep.subr.mxu0 0.0
    %766 = vmatpush2.msra.mxu0 %v459
    %767 = vmatprep.mubr.f32.mxu0 %v384
    %768 = vmatmul.mubr.f32.gmra.mxu0 %v381
    %v769 = vpop.f32.mrf.mxu0
    %v770 = vadd.f32 %v702, %v769
    %v771 = vpop.f32.mrf.mxu0
    %772 = vdwg.mxu0
    %773 = vmatprep.subr.mxu0 0.0
    %774 = vmatpush1.msra.mxu0 %v490
    %775 = vmatprep.subr.mxu0 0.0
    %776 = vmatpush1.msra.mxu0 %v489
    %777 = vmatprep.subr.mxu0 0.0
    %778 = vmatpush1.msra.mxu0 %v488
    %779 = vmatprep.subr.mxu0 0.0
    %780 = vmatpush1.msra.mxu0 %v487
    %781 = vmatprep.subr.mxu0 0.0
    %782 = vmatpush1.msra.mxu0 %v486
    %783 = vmatprep.subr.mxu0 0.0
    %784 = vmatpush1.msra.mxu0 %v485
    %785 = vmatprep.subr.mxu0 0.0
    %786 = vmatpush1.msra.mxu0 %v484
    %787 = vmatprep.subr.mxu0 0.0
    %788 = vmatpush1.msra.mxu0 %v483
    %789 = vmatprep.subr.mxu0 0.0
    %790 = vmatpush1.msra.mxu0 %v482
    %791 = vmatprep.subr.mxu0 0.0
    %792 = vmatpush1.msra.mxu0 %v481
    %793 = vmatprep.subr.mxu0 0.0
    %794 = vmatpush1.msra.mxu0 %v480
    %795 = vmatprep.subr.mxu0 0.0
    %796 = vmatpush1.msra.mxu0 %v479
    %797 = vmatprep.subr.mxu0 0.0
    %798 = vmatpush1.msra.mxu0 %v478
    %799 = vmatprep.subr.mxu0 0.0
    %800 = vmatpush1.msra.mxu0 %v477
    %801 = vmatprep.subr.mxu0 0.0
    %802 = vmatpush1.msra.mxu0 %v476
    %803 = vmatprep.subr.mxu0 0.0
    %804 = vmatpush1.msra.mxu0 %v475
    %805 = vmatprep.subr.mxu0 0.0
    %806 = vmatpush2.msra.mxu0 %v506
    %807 = vmatprep.subr.mxu0 0.0
    %808 = vmatpush2.msra.mxu0 %v505
    %809 = vmatprep.subr.mxu0 0.0
    %810 = vmatpush2.msra.mxu0 %v504
    %811 = vmatprep.subr.mxu0 0.0
    %812 = vmatpush2.msra.mxu0 %v503
    %813 = vmatprep.subr.mxu0 0.0
    %814 = vmatpush2.msra.mxu0 %v502
    %815 = vmatprep.subr.mxu0 0.0
    %816 = vmatpush2.msra.mxu0 %v501
    %817 = vmatprep.subr.mxu0 0.0
    %818 = vmatpush2.msra.mxu0 %v500
    %819 = vmatprep.subr.mxu0 0.0
    %820 = vmatpush2.msra.mxu0 %v499
    %821 = vmatprep.subr.mxu0 0.0
    %822 = vmatpush2.msra.mxu0 %v498
    %823 = vmatprep.subr.mxu0 0.0
    %824 = vmatpush2.msra.mxu0 %v497
    %825 = vmatprep.subr.mxu0 0.0
    %826 = vmatpush2.msra.mxu0 %v496
    %827 = vmatprep.subr.mxu0 0.0
    %828 = vmatpush2.msra.mxu0 %v495
    %829 = vmatprep.subr.mxu0 0.0
    %830 = vmatpush2.msra.mxu0 %v494
    %831 = vmatprep.subr.mxu0 0.0
    %832 = vmatpush2.msra.mxu0 %v493
    %833 = vmatprep.subr.mxu0 0.0
    %834 = vmatpush2.msra.mxu0 %v492
    %835 = vmatprep.subr.mxu0 0.0
    %836 = vmatpush2.msra.mxu0 %v491
    %837 = vmatprep.mubr.f32.mxu0 %v392
    %838 = vmatmul.mubr.f32.gmra.mxu0 %v388
    %v839 = vpop.f32.mrf.mxu0
    %v840 = vadd.f32 %v770, %v839
    %v841 = vpop.f32.mrf.mxu0
    %842 = vdwg.mxu0
    %843 = vmatprep.subr.mxu0 0.0
    %844 = vmatpush1.msra.mxu0 %v522
    %845 = vmatprep.subr.mxu0 0.0
    %846 = vmatpush1.msra.mxu0 %v521
    %847 = vmatprep.subr.mxu0 0.0
    %848 = vmatpush1.msra.mxu0 %v520
    %849 = vmatprep.subr.mxu0 0.0
    %850 = vmatpush1.msra.mxu0 %v519
    %851 = vmatprep.subr.mxu0 0.0
    %852 = vmatpush1.msra.mxu0 %v518
    %853 = vmatprep.subr.mxu0 0.0
    %854 = vmatpush1.msra.mxu0 %v517
    %855 = vmatprep.subr.mxu0 0.0
    %856 = vmatpush1.msra.mxu0 %v516
    %857 = vmatprep.subr.mxu0 0.0
    %858 = vmatpush1.msra.mxu0 %v515
    %859 = vmatprep.subr.mxu0 0.0
    %860 = vmatpush1.msra.mxu0 %v514
    %861 = vmatprep.subr.mxu0 0.0
    %862 = vmatpush1.msra.mxu0 %v513
    %863 = vmatprep.subr.mxu0 0.0
    %864 = vmatpush1.msra.mxu0 %v512
    %865 = vmatprep.subr.mxu0 0.0
    %866 = vmatpush1.msra.mxu0 %v511
    %867 = vmatprep.subr.mxu0 0.0
    %868 = vmatpush1.msra.mxu0 %v510
    %869 = vmatprep.subr.mxu0 0.0
    %870 = vmatpush1.msra.mxu0 %v509
    %871 = vmatprep.subr.mxu0 0.0
    %872 = vmatpush1.msra.mxu0 %v508
    %873 = vmatprep.subr.mxu0 0.0
    %874 = vmatpush1.msra.mxu0 %v507
    %875 = vmatprep.subr.mxu0 0.0
    %876 = vmatpush2.msra.mxu0 %v538
    %877 = vmatprep.subr.mxu0 0.0
    %878 = vmatpush2.msra.mxu0 %v537
    %879 = vmatprep.subr.mxu0 0.0
    %880 = vmatpush2.msra.mxu0 %v536
    %881 = vmatprep.subr.mxu0 0.0
    %882 = vmatpush2.msra.mxu0 %v535
    %883 = vmatprep.subr.mxu0 0.0
    %884 = vmatpush2.msra.mxu0 %v534
    %885 = vmatprep.subr.mxu0 0.0
    %886 = vmatpush2.msra.mxu0 %v533
    %887 = vmatprep.subr.mxu0 0.0
    %888 = vmatpush2.msra.mxu0 %v532
    %889 = vmatprep.subr.mxu0 0.0
    %890 = vmatpush2.msra.mxu0 %v531
    %891 = vmatprep.subr.mxu0 0.0
    %892 = vmatpush2.msra.mxu0 %v530
    %893 = vmatprep.subr.mxu0 0.0
    %894 = vmatpush2.msra.mxu0 %v529
    %895 = vmatprep.subr.mxu0 0.0
    %896 = vmatpush2.msra.mxu0 %v528
    %897 = vmatprep.subr.mxu0 0.0
    %898 = vmatpush2.msra.mxu0 %v527
    %899 = vmatprep.subr.mxu0 0.0
    %900 = vmatpush2.msra.mxu0 %v526
    %901 = vmatprep.subr.mxu0 0.0
    %902 = vmatpush2.msra.mxu0 %v525
    %903 = vmatprep.subr.mxu0 0.0
    %904 = vmatpush2.msra.mxu0 %v524
    %905 = vmatprep.subr.mxu0 0.0
    %906 = vmatpush2.msra.mxu0 %v523
    %907 = vmatprep.mubr.f32.mxu0 %v400
    %908 = vmatmul.mubr.f32.gmra.mxu0 %v396
    %v909 = vpop.f32.mrf.mxu0
    %v910 = vadd.f32 %v840, %v909
    %v911 = vpop.f32.mrf.mxu0
    %912 = vdwg.mxu0
    %913 = vmatprep.subr.mxu0 0.0
    %914 = vmatpush1.msra.mxu0 %v554
    %915 = vmatprep.subr.mxu0 0.0
    %916 = vmatpush1.msra.mxu0 %v553
    %917 = vmatprep.subr.mxu0 0.0
    %918 = vmatpush1.msra.mxu0 %v552
    %919 = vmatprep.subr.mxu0 0.0
    %920 = vmatpush1.msra.mxu0 %v551
    %921 = vmatprep.subr.mxu0 0.0
    %922 = vmatpush1.msra.mxu0 %v550
    %923 = vmatprep.subr.mxu0 0.0
    %924 = vmatpush1.msra.mxu0 %v549
    %925 = vmatprep.subr.mxu0 0.0
    %926 = vmatpush1.msra.mxu0 %v548
    %927 = vmatprep.subr.mxu0 0.0
    %928 = vmatpush1.msra.mxu0 %v547
    %929 = vmatprep.subr.mxu0 0.0
    %930 = vmatpush1.msra.mxu0 %v546
    %931 = vmatprep.subr.mxu0 0.0
    %932 = vmatpush1.msra.mxu0 %v545
    %933 = vmatprep.subr.mxu0 0.0
    %934 = vmatpush1.msra.mxu0 %v544
    %935 = vmatprep.subr.mxu0 0.0
    %936 = vmatpush1.msra.mxu0 %v543
    %937 = vmatprep.subr.mxu0 0.0
    %938 = vmatpush1.msra.mxu0 %v542
    %939 = vmatprep.subr.mxu0 0.0
    %940 = vmatpush1.msra.mxu0 %v541
    %941 = vmatprep.subr.mxu0 0.0
    %942 = vmatpush1.msra.mxu0 %v540
    %943 = vmatprep.subr.mxu0 0.0
    %944 = vmatpush1.msra.mxu0 %v539
    %945 = vmatprep.subr.mxu0 0.0
    %946 = vmatpush2.msra.mxu0 %v570
    %947 = vmatprep.subr.mxu0 0.0
    %948 = vmatpush2.msra.mxu0 %v569
    %949 = vmatprep.subr.mxu0 0.0
    %950 = vmatpush2.msra.mxu0 %v568
    %951 = vmatprep.subr.mxu0 0.0
    %952 = vmatpush2.msra.mxu0 %v567
    %953 = vmatprep.subr.mxu0 0.0
    %954 = vmatpush2.msra.mxu0 %v566
    %955 = vmatprep.subr.mxu0 0.0
    %956 = vmatpush2.msra.mxu0 %v565
    %957 = vmatprep.subr.mxu0 0.0
    %958 = vmatpush2.msra.mxu0 %v564
    %959 = vmatprep.subr.mxu0 0.0
    %960 = vmatpush2.msra.mxu0 %v563
    %961 = vmatprep.subr.mxu0 0.0
    %962 = vmatpush2.msra.mxu0 %v562
    %963 = vmatprep.subr.mxu0 0.0
    %964 = vmatpush2.msra.mxu0 %v561
    %965 = vmatprep.subr.mxu0 0.0
    %966 = vmatpush2.msra.mxu0 %v560
    %967 = vmatprep.subr.mxu0 0.0
    %968 = vmatpush2.msra.mxu0 %v559
    %969 = vmatprep.subr.mxu0 0.0
    %970 = vmatpush2.msra.mxu0 %v558
    %971 = vmatprep.subr.mxu0 0.0
    %972 = vmatpush2.msra.mxu0 %v557
    %973 = vmatprep.subr.mxu0 0.0
    %974 = vmatpush2.msra.mxu0 %v556
    %975 = vmatprep.subr.mxu0 0.0
    %976 = vmatpush2.msra.mxu0 %v555
    %977 = vmatprep.mubr.f32.mxu0 %v408
    %978 = vmatmul.mubr.f32.gmra.mxu0 %v404
    %v979 = vpop.f32.mrf.mxu0
    %v980 = vadd.f32 %v910, %v979
    %v981 = vpop.f32.mrf.mxu0
    %982 = vdwg.mxu0
    %983 = vmatprep.subr.mxu0 0.0
    %984 = vmatpush1.msra.mxu0 %v586
    %985 = vmatprep.subr.mxu0 0.0
    %986 = vmatpush1.msra.mxu0 %v585
    %987 = vmatprep.subr.mxu0 0.0
    %988 = vmatpush1.msra.mxu0 %v584
    %989 = vmatprep.subr.mxu0 0.0
    %990 = vmatpush1.msra.mxu0 %v583
    %991 = vmatprep.subr.mxu0 0.0
    %992 = vmatpush1.msra.mxu0 %v582
    %993 = vmatprep.subr.mxu0 0.0
    %994 = vmatpush1.msra.mxu0 %v581
    %995 = vmatprep.subr.mxu0 0.0
    %996 = vmatpush1.msra.mxu0 %v580
    %997 = vmatprep.subr.mxu0 0.0
    %998 = vmatpush1.msra.mxu0 %v579
    %999 = vmatprep.subr.mxu0 0.0
    %1000 = vmatpush1.msra.mxu0 %v578
    %1001 = vmatprep.subr.mxu0 0.0
    %1002 = vmatpush1.msra.mxu0 %v577
    %1003 = vmatprep.subr.mxu0 0.0
    %1004 = vmatpush1.msra.mxu0 %v576
    %1005 = vmatprep.subr.mxu0 0.0
    %1006 = vmatpush1.msra.mxu0 %v575
    %1007 = vmatprep.subr.mxu0 0.0
    %1008 = vmatpush1.msra.mxu0 %v574
    %1009 = vmatprep.subr.mxu0 0.0
    %1010 = vmatpush1.msra.mxu0 %v573
    %1011 = vmatprep.subr.mxu0 0.0
    %1012 = vmatpush1.msra.mxu0 %v572
    %1013 = vmatprep.subr.mxu0 0.0
    %1014 = vmatpush1.msra.mxu0 %v571
    %1015 = vmatprep.subr.mxu0 0.0
    %1016 = vmatpush2.msra.mxu0 %v602
    %1017 = vmatprep.subr.mxu0 0.0
    %1018 = vmatpush2.msra.mxu0 %v601
    %1019 = vmatprep.subr.mxu0 0.0
    %1020 = vmatpush2.msra.mxu0 %v600
    %1021 = vmatprep.subr.mxu0 0.0
    %1022 = vmatpush2.msra.mxu0 %v599
    %1023 = vmatprep.subr.mxu0 0.0
    %1024 = vmatpush2.msra.mxu0 %v598
    %1025 = vmatprep.subr.mxu0 0.0
    %1026 = vmatpush2.msra.mxu0 %v597
    %1027 = vmatprep.subr.mxu0 0.0
    %1028 = vmatpush2.msra.mxu0 %v596
    %1029 = vmatprep.subr.mxu0 0.0
    %1030 = vmatpush2.msra.mxu0 %v595
    %1031 = vmatprep.subr.mxu0 0.0
    %1032 = vmatpush2.msra.mxu0 %v594
    %1033 = vmatprep.subr.mxu0 0.0
    %1034 = vmatpush2.msra.mxu0 %v593
    %1035 = vmatprep.subr.mxu0 0.0
    %1036 = vmatpush2.msra.mxu0 %v592
    %1037 = vmatprep.subr.mxu0 0.0
    %1038 = vmatpush2.msra.mxu0 %v591
    %1039 = vmatprep.subr.mxu0 0.0
    %1040 = vmatpush2.msra.mxu0 %v590
    %1041 = vmatprep.subr.mxu0 0.0
    %1042 = vmatpush2.msra.mxu0 %v589
    %1043 = vmatprep.subr.mxu0 0.0
    %1044 = vmatpush2.msra.mxu0 %v588
    %1045 = vmatprep.subr.mxu0 0.0
    %1046 = vmatpush2.msra.mxu0 %v587
    %1047 = vmatprep.mubr.f32.mxu0 %v416
    %1048 = vmatmul.mubr.f32.gmra.mxu0 %v413
    %v1049 = vpop.f32.mrf.mxu0
    %v1050 = vadd.f32 %v980, %v1049
    %v1051 = vpop.f32.mrf.mxu0
    %1052 = vdwg.mxu0
    %1053 = vmatprep.subr.mxu0 0.0
    %1054 = vmatpush1.msra.mxu0 %v618
    %1055 = vmatprep.subr.mxu0 0.0
    %1056 = vmatpush1.msra.mxu0 %v617
    %1057 = vmatprep.subr.mxu0 0.0
    %1058 = vmatpush1.msra.mxu0 %v616
    %1059 = vmatprep.subr.mxu0 0.0
    %1060 = vmatpush1.msra.mxu0 %v615
    %1061 = vmatprep.subr.mxu0 0.0
    %1062 = vmatpush1.msra.mxu0 %v614
    %1063 = vmatprep.subr.mxu0 0.0
    %1064 = vmatpush1.msra.mxu0 %v613
    %1065 = vmatprep.subr.mxu0 0.0
    %1066 = vmatpush1.msra.mxu0 %v612
    %1067 = vmatprep.subr.mxu0 0.0
    %1068 = vmatpush1.msra.mxu0 %v611
    %1069 = vmatprep.subr.mxu0 0.0
    %1070 = vmatpush1.msra.mxu0 %v610
    %1071 = vmatprep.subr.mxu0 0.0
    %1072 = vmatpush1.msra.mxu0 %v609
    %1073 = vmatprep.subr.mxu0 0.0
    %1074 = vmatpush1.msra.mxu0 %v608
    %1075 = vmatprep.subr.mxu0 0.0
    %1076 = vmatpush1.msra.mxu0 %v607
    %1077 = vmatprep.subr.mxu0 0.0
    %1078 = vmatpush1.msra.mxu0 %v606
    %1079 = vmatprep.subr.mxu0 0.0
    %1080 = vmatpush1.msra.mxu0 %v605
    %1081 = vmatprep.subr.mxu0 0.0
    %1082 = vmatpush1.msra.mxu0 %v604
    %1083 = vmatprep.subr.mxu0 0.0
    %1084 = vmatpush1.msra.mxu0 %v603
    %1085 = vmatprep.subr.mxu0 0.0
    %1086 = vmatpush2.msra.mxu0 %v634
    %1087 = vmatprep.subr.mxu0 0.0
    %1088 = vmatpush2.msra.mxu0 %v633
    %1089 = vmatprep.subr.mxu0 0.0
    %1090 = vmatpush2.msra.mxu0 %v632
    %1091 = vmatprep.subr.mxu0 0.0
    %1092 = vmatpush2.msra.mxu0 %v631
    %1093 = vmatprep.subr.mxu0 0.0
    %1094 = vmatpush2.msra.mxu0 %v630
    %1095 = vmatprep.subr.mxu0 0.0
    %1096 = vmatpush2.msra.mxu0 %v629
    %1097 = vmatprep.subr.mxu0 0.0
    %1098 = vmatpush2.msra.mxu0 %v628
    %1099 = vmatprep.subr.mxu0 0.0
    %1100 = vmatpush2.msra.mxu0 %v627
    %1101 = vmatprep.subr.mxu0 0.0
    %1102 = vmatpush2.msra.mxu0 %v626
    %1103 = vmatprep.subr.mxu0 0.0
    %1104 = vmatpush2.msra.mxu0 %v625
    %1105 = vmatprep.subr.mxu0 0.0
    %1106 = vmatpush2.msra.mxu0 %v624
    %1107 = vmatprep.subr.mxu0 0.0
    %1108 = vmatpush2.msra.mxu0 %v623
    %1109 = vmatprep.subr.mxu0 0.0
    %1110 = vmatpush2.msra.mxu0 %v622
    %1111 = vmatprep.subr.mxu0 0.0
    %1112 = vmatpush2.msra.mxu0 %v621
    %1113 = vmatprep.subr.mxu0 0.0
    %1114 = vmatpush2.msra.mxu0 %v620
    %1115 = vmatprep.subr.mxu0 0.0
    %1116 = vmatpush2.msra.mxu0 %v619
    %1117 = vmatprep.mubr.f32.mxu0 %v424
    %1118 = vmatmul.mubr.f32.gmra.mxu0 %v420
    %v1119 = vpop.f32.mrf.mxu0
    %v1120 = vadd.f32 %v1050, %v1119
    %v1121 = vpop.f32.mrf.mxu0
    %1122 = vdwg.mxu0
    %1123 = vmatprep.subr.mxu0 0.0
    %1124 = vmatpush1.msra.mxu0 %v650
    %1125 = vmatprep.subr.mxu0 0.0
    %1126 = vmatpush1.msra.mxu0 %v649
    %1127 = vmatprep.subr.mxu0 0.0
    %1128 = vmatpush1.msra.mxu0 %v648
    %1129 = vmatprep.subr.mxu0 0.0
    %1130 = vmatpush1.msra.mxu0 %v647
    %1131 = vmatprep.subr.mxu0 0.0
    %1132 = vmatpush1.msra.mxu0 %v646
    %1133 = vmatprep.subr.mxu0 0.0
    %1134 = vmatpush1.msra.mxu0 %v645
    %1135 = vmatprep.subr.mxu0 0.0
    %1136 = vmatpush1.msra.mxu0 %v644
    %1137 = vmatprep.subr.mxu0 0.0
    %1138 = vmatpush1.msra.mxu0 %v643
    %1139 = vmatprep.subr.mxu0 0.0
    %1140 = vmatpush1.msra.mxu0 %v642
    %1141 = vmatprep.subr.mxu0 0.0
    %1142 = vmatpush1.msra.mxu0 %v641
    %1143 = vmatprep.subr.mxu0 0.0
    %1144 = vmatpush1.msra.mxu0 %v640
    %1145 = vmatprep.subr.mxu0 0.0
    %1146 = vmatpush1.msra.mxu0 %v639
    %1147 = vmatprep.subr.mxu0 0.0
    %1148 = vmatpush1.msra.mxu0 %v638
    %1149 = vmatprep.subr.mxu0 0.0
    %1150 = vmatpush1.msra.mxu0 %v637
    %1151 = vmatprep.subr.mxu0 0.0
    %1152 = vmatpush1.msra.mxu0 %v636
    %1153 = vmatprep.subr.mxu0 0.0
    %1154 = vmatpush1.msra.mxu0 %v635
    %1155 = vmatprep.subr.mxu0 0.0
    %1156 = vmatpush2.msra.mxu0 %v666
    %1157 = vmatprep.subr.mxu0 0.0
    %1158 = vmatpush2.msra.mxu0 %v665
    %1159 = vmatprep.subr.mxu0 0.0
    %1160 = vmatpush2.msra.mxu0 %v664
    %1161 = vmatprep.subr.mxu0 0.0
    %1162 = vmatpush2.msra.mxu0 %v663
    %1163 = vmatprep.subr.mxu0 0.0
    %1164 = vmatpush2.msra.mxu0 %v662
    %1165 = vmatprep.subr.mxu0 0.0
    %1166 = vmatpush2.msra.mxu0 %v661
    %1167 = vmatprep.subr.mxu0 0.0
    %1168 = vmatpush2.msra.mxu0 %v660
    %1169 = vmatprep.subr.mxu0 0.0
    %1170 = vmatpush2.msra.mxu0 %v659
    %1171 = vmatprep.subr.mxu0 0.0
    %1172 = vmatpush2.msra.mxu0 %v658
    %1173 = vmatprep.subr.mxu0 0.0
    %1174 = vmatpush2.msra.mxu0 %v657
    %1175 = vmatprep.subr.mxu0 0.0
    %1176 = vmatpush2.msra.mxu0 %v656
    %1177 = vmatprep.subr.mxu0 0.0
    %1178 = vmatpush2.msra.mxu0 %v655
    %1179 = vmatprep.subr.mxu0 0.0
    %1180 = vmatpush2.msra.mxu0 %v654
    %1181 = vmatprep.subr.mxu0 0.0
    %1182 = vmatpush2.msra.mxu0 %v653
    %1183 = vmatprep.subr.mxu0 0.0
    %1184 = vmatpush2.msra.mxu0 %v652
    %1185 = vmatprep.subr.mxu0 0.0
    %1186 = vmatpush2.msra.mxu0 %v651
    %1187 = vmatprep.mubr.f32.mxu0 %v432
    %1188 = vmatmul.mubr.f32.gmra.mxu0 %v428
    %v1189 = vpop.f32.mrf.mxu0
    %v1190 = vadd.f32 %v1120, %v1189
    %v1191 = vpop.f32.mrf.mxu0
    %1192 = vdwg.mxu0
    %1193 = vmatprep.subr.mxu0 0.0
    %1194 = vmatpush1.msra.mxu0 %v682
    %1195 = vmatprep.subr.mxu0 0.0
    %1196 = vmatpush1.msra.mxu0 %v681
    %1197 = vmatprep.subr.mxu0 0.0
    %1198 = vmatpush1.msra.mxu0 %v680
    %1199 = vmatprep.subr.mxu0 0.0
    %1200 = vmatpush1.msra.mxu0 %v679
    %1201 = vmatprep.subr.mxu0 0.0
    %1202 = vmatpush1.msra.mxu0 %v678
    %1203 = vmatprep.subr.mxu0 0.0
    %1204 = vmatpush1.msra.mxu0 %v677
    %1205 = vmatprep.subr.mxu0 0.0
    %1206 = vmatpush1.msra.mxu0 %v676
    %1207 = vmatprep.subr.mxu0 0.0
    %1208 = vmatpush1.msra.mxu0 %v675
    %1209 = vmatprep.subr.mxu0 0.0
    %1210 = vmatpush1.msra.mxu0 %v674
    %1211 = vmatprep.subr.mxu0 0.0
    %1212 = vmatpush1.msra.mxu0 %v673
    %1213 = vmatprep.subr.mxu0 0.0
    %1214 = vmatpush1.msra.mxu0 %v672
    %1215 = vmatprep.subr.mxu0 0.0
    %1216 = vmatpush1.msra.mxu0 %v671
    %1217 = vmatprep.subr.mxu0 0.0
    %1218 = vmatpush1.msra.mxu0 %v670
    %1219 = vmatprep.subr.mxu0 0.0
    %1220 = vmatpush1.msra.mxu0 %v669
    %1221 = vmatprep.subr.mxu0 0.0
    %1222 = vmatpush1.msra.mxu0 %v668
    %1223 = vmatprep.subr.mxu0 0.0
    %1224 = vmatpush1.msra.mxu0 %v667
    %1225 = vmatprep.subr.mxu0 0.0
    %1226 = vmatpush2.msra.mxu0 %v698
    %1227 = vmatprep.subr.mxu0 0.0
    %1228 = vmatpush2.msra.mxu0 %v697
    %1229 = vmatprep.subr.mxu0 0.0
    %1230 = vmatpush2.msra.mxu0 %v696
    %1231 = vmatprep.subr.mxu0 0.0
    %1232 = vmatpush2.msra.mxu0 %v695
    %1233 = vmatprep.subr.mxu0 0.0
    %1234 = vmatpush2.msra.mxu0 %v694
    %1235 = vmatprep.subr.mxu0 0.0
    %1236 = vmatpush2.msra.mxu0 %v693
    %1237 = vmatprep.subr.mxu0 0.0
    %1238 = vmatpush2.msra.mxu0 %v692
    %1239 = vmatprep.subr.mxu0 0.0
    %1240 = vmatpush2.msra.mxu0 %v691
    %1241 = vmatprep.subr.mxu0 0.0
    %1242 = vmatpush2.msra.mxu0 %v690
    %1243 = vmatprep.subr.mxu0 0.0
    %1244 = vmatpush2.msra.mxu0 %v689
    %1245 = vmatprep.subr.mxu0 0.0
    %1246 = vmatpush2.msra.mxu0 %v688
    %1247 = vmatprep.subr.mxu0 0.0
    %1248 = vmatpush2.msra.mxu0 %v687
    %1249 = vmatprep.subr.mxu0 0.0
    %1250 = vmatpush2.msra.mxu0 %v686
    %1251 = vmatprep.subr.mxu0 0.0
    %1252 = vmatpush2.msra.mxu0 %v685
    %1253 = vmatprep.subr.mxu0 0.0
    %1254 = vmatpush2.msra.mxu0 %v684
    %1255 = vmatprep.subr.mxu0 0.0
    %1256 = vmatpush2.msra.mxu0 %v683
    %1257 = vmatprep.mubr.f32.mxu0 %v440
    %1258 = vmatmul.mubr.f32.gmra.mxu0 %v436
    %v1259 = vpop.f32.mrf.mxu0
    %v1260 = vadd.f32 %v1190, %v1259
    %v1261 = vpop.f32.mrf.mxu0
    %1262 = vdwg.mxu0
    %v1263 = vmax.f32 %v1260, 0.0
    %v1264 = vld [vmem:[%s1 + $0x190] sm:$0xff]
    %v1265 = vld [vmem:[%s1 + $0x198] sm:$0xff]
    %v1266 = vld [vmem:[%s1 + $0x1a0] sm:$0xff]
    %v1267 = vld [vmem:[%s1 + $0x1a8] sm:$0xff]
    %v1268 = vld [vmem:[%s1 + $0x1b0] sm:$0x1]
    %v1269 = vlaneseq
    %v1270 = vshrl.u32 %v1269, 7
    %v1271 = vsub.s32 0, %v1270
    %v1272 = vrot.slane %v1268, %v1271
    %vm1273 = vcmask 261120
    %v1275 = vsel %vm1273, %v1263, 0
    %1277 = vmatprep.subr.mxu0 0.0
    %1278 = vmatpush1.msra.mxu0 0.0
    %1279 = vmatprep.subr.mxu0 0.0
    %1280 = vmatpush1.msra.mxu0 0.0
    %1281 = vmatprep.subr.mxu0 0.0
    %1282 = vmatpush1.msra.mxu0 0.0
    %1283 = vmatprep.subr.mxu0 0.0
    %1284 = vmatpush1.msra.mxu0 0.0
    %1285 = vmatprep.subr.mxu0 0.0
    %1286 = vmatpush1.msra.mxu0 0.0
    %1287 = vmatprep.subr.mxu0 0.0
    %1288 = vmatpush1.msra.mxu0 0.0
    %1289 = vmatprep.subr.mxu0 0.0
    %1290 = vmatpush1.msra.mxu0 0.0
    %1291 = vmatprep.subr.mxu0 0.0
    %1292 = vmatpush1.msra.mxu0 0.0
    %1293 = vmatprep.subr.mxu0 0.0
    %1294 = vmatpush1.msra.mxu0 0.0
    %1295 = vmatprep.subr.mxu0 0.0
    %1296 = vmatpush1.msra.mxu0 0.0
    %1297 = vmatprep.subr.mxu0 0.0
    %1298 = vmatpush1.msra.mxu0 0.0
    %1299 = vmatprep.subr.mxu0 0.0
    %1300 = vmatpush1.msra.mxu0 0.0
    %1301 = vmatprep.subr.mxu0 0.0
    %1302 = vmatpush1.msra.mxu0 %v1267
    %1303 = vmatprep.subr.mxu0 0.0
    %1304 = vmatpush1.msra.mxu0 %v1266
    %1305 = vmatprep.subr.mxu0 0.0
    %1306 = vmatpush1.msra.mxu0 %v1265
    %1307 = vmatprep.subr.mxu0 0.0
    %1308 = vmatpush1.msra.mxu0 %v1264
    %1309 = vmatprep.subr.mxu0 0.0
    %1310 = vmatpush2.msra.mxu0 0.0
    %1311 = vmatprep.subr.mxu0 0.0
    %1312 = vmatpush2.msra.mxu0 0.0
    %1313 = vmatprep.subr.mxu0 0.0
    %1314 = vmatpush2.msra.mxu0 0.0
    %1315 = vmatprep.subr.mxu0 0.0
    %1316 = vmatpush2.msra.mxu0 0.0
    %1317 = vmatprep.subr.mxu0 0.0
    %1318 = vmatpush2.msra.mxu0 0.0
    %1319 = vmatprep.subr.mxu0 0.0
    %1320 = vmatpush2.msra.mxu0 0.0
    %1321 = vmatprep.subr.mxu0 0.0
    %1322 = vmatpush2.msra.mxu0 0.0
    %1323 = vmatprep.subr.mxu0 0.0
    %1324 = vmatpush2.msra.mxu0 0.0
    %1325 = vmatprep.subr.mxu0 0.0
    %1326 = vmatpush2.msra.mxu0 0.0
    %1327 = vmatprep.subr.mxu0 0.0
    %1328 = vmatpush2.msra.mxu0 0.0
    %1329 = vmatprep.subr.mxu0 0.0
    %1330 = vmatpush2.msra.mxu0 0.0
    %1331 = vmatprep.subr.mxu0 0.0
    %1332 = vmatpush2.msra.mxu0 0.0
    %1333 = vmatprep.subr.mxu0 0.0
    %1334 = vmatpush2.msra.mxu0 0.0
    %1335 = vmatprep.subr.mxu0 0.0
    %1336 = vmatpush2.msra.mxu0 0.0
    %1337 = vmatprep.subr.mxu0 0.0
    %1338 = vmatpush2.msra.mxu0 0.0
    %1339 = vmatprep.subr.mxu0 0.0
    %1340 = vmatpush2.msra.mxu0 0.0
    %1341 = vmatprep.mubr.f32.mxu0 0.0
    %1342 = vmatmul.mubr.f32.gmra.mxu0 %v1275
    %v1343 = vpop.f32.mrf.mxu0
    %v1344 = vadd.f32 %v1272, %v1343
    %v1345 = vpop.f32.mrf.mxu0
    %1346 = vdwg.mxu0
    %vm1347 = vcmask 74752
    %1348 = vst.msk [vmem:[#allocation2] sm:$0x3] %vm1347, %v1344
    // Predicated region
    $region14: #{_fused_forward.1} parent=1 // pred_check
      _
    $region15: #{_fused_forward.1} parent=1 // pred_check_branch
      %1350 = sbr.rel (0) target = $region17
    $region16: #{_fused_forward.1} parent=1 // pred_region
      %s1352 = ssub.s32 32, 32
      %1353 = vsyncadd [#allocation3], %s1352
      %s1355 = sshll.u32 [#allocation2], 4
      %s1356 = int_to_ptr.vmem [resolvable:$true] %s1355
      %1358 = dma.vmem_to_hbm [thread:$0]  %s1356, 32, %s3, [#allocation3]
    $region17: #{_fused_forward.1} parent=1 // pred_fallthru
      _
    // Predicated region
    $region18: #{_fused_forward.1} parent=1 // pred_check
      _
    $region19: #{_fused_forward.1} parent=1 // pred_check_branch
      %1360 = sbr.rel (0) target = $region21
    $region20: #{_fused_forward.1} parent=1 // pred_region
      %1361 = dma.done [#allocation3], 32
    $region21: #{_fused_forward.1} parent=1 // pred_fallthru
      _
    %1362 = vsyncpa [#allocation3], 1

</llo_original>
